<compile_context>
chip_gen: v6e
topology: v6e:2x2x1
jax: 0.10.0
libtpu: 0.0.40
codegen_flags: <defaults>
</compile_context>

<pallas_src>
import functools

import jax
import jax.numpy as jnp
from jax import lax
from jax.experimental import pallas as pl
from jax.experimental.pallas import tpu as pltpu


def _round_up(x, m):
    return (x + m - 1) // m * m


def _vmem_budget_bytes():
    """Generation-aware scoped-VMEM budget, leaving headroom for Mosaic scratch."""
    try:
        cap = int(pltpu.get_tpu_info().vmem_capacity_bytes)
    except Exception:
        cap = 64 << 20          # conservative fallback: v7x per-core VMEM
    return max(cap - (16 << 20), 24 << 20)


def _pass1_need_bytes(tm, npad, fpad, x_bytes):
    f32 = 4
    return (8 * tm * npad * f32                        # in-body f32 temps
            + 2 * (tm * fpad + npad * fpad) * x_bytes  # double-buffered inputs
            + 2 * tm * npad * f32)                     # double-buffered output


def _pick_row_tile(npad, fpad, x_bytes, budget):
    for t in (512, 256, 128):
        if npad % t == 0 and _pass1_need_bytes(t, npad, fpad, x_bytes) <= budget:
            return t
    return 128  # npad is always a multiple of 128


def _rowwise_kernel(x_rows_ref, x_full_ref, out_ref, *, n_real):
    """Gram row tile -> zero-diag -> fused row softmax + max-rescale.

    x_rows_ref: (1, TM, FP)  row tile of padded X
    x_full_ref: (1, NP, FP)  full padded X for this batch element
    out_ref:    (1, TM, NP)  A_nonsym row tile (f32)
    """
    i = pl.program_id(1)

    xq = x_rows_ref[0]
    xk = x_full_ref[0]

    # prod = Xq @ Xk^T  (contract feature axis; no explicit transpose).
    # precision=HIGHEST keeps full f32 accuracy for f32 operands on the MXU;
    # the bf16 fast path is chosen by casting the operands in the wrapper.
    prod = lax.dot_general(
        xq, xk,
        dimension_numbers=(((1,), (1,)), ((), ())),
        preferred_element_type=jnp.float32,
        precision=lax.Precision.HIGHEST,
    )                                                      # (TM, NP) f32

    tm, npad = prod.shape
    # Narrow iotas broadcast-compared (no full (TM, NP) int32 planes).
    row_ids = lax.broadcasted_iota(jnp.int32, (tm, 1), 0) + i * tm   # (TM, 1)
    col_ids = lax.broadcasted_iota(jnp.int32, (1, npad), 1)          # (1, NP)
    diag = row_ids == col_ids                                        # (TM, NP)

    # zero_diag(prod); mask padded key columns so they contribute exactly 0
    # to the row statistics (exp underflows to 0).
    logits = jnp.where(diag, jnp.float32(0.0), prod)
    if n_real < npad:
        logits = jnp.where(col_ids >= n_real, jnp.float32(-1e30), logits)

    # Fused row softmax + rescale.  Since the diagonal of sm_zero is exactly 0
    # and softmax outputs are >= 0, mi == 0, so:
    #   out = sm_zero / (max(sm_zero) + eps)
    #       = ex_zero * (r / (max(ex_zero) * r + eps)),   r = 1/sum(ex)
    # All per-row scalars are (TM, 1): the reciprocals are exact and cheap.
    m = jnp.max(logits, axis=-1, keepdims=True)
    ex = jnp.exp(logits - m)
    ex_zero = jnp.where(diag, jnp.float32(0.0), ex)
    r = 1.0 / jnp.sum(ex, axis=-1, keepdims=True)          # (TM, 1), exact
    ma = jnp.max(ex_zero, axis=-1, keepdims=True) * r      # == max(sm_zero)
    eps = jnp.float32(jnp.finfo(jnp.float32).eps)
    scale = r / (ma + eps)                                  # (TM, 1), exact
    out_ref[0] = (ex_zero * scale).astype(out_ref.dtype)


def _symmetrize_kernel(a_ref, out_ref):
    """A = triu(A') + triu(A')^T from the single (min(i,j), max(i,j)) block.

    a_ref:   (1, TM, TM)  block (min(i,j), max(i,j)) of A'
    out_ref: (1, TM, TM)  block (i, j) of the symmetrized output
    """
    i = pl.program_id(1)
    j = pl.program_id(2)

    @pl.when(i < j)
    def _():                                   # strictly above diagonal: copy
        out_ref[0] = a_ref[0].astype(out_ref.dtype)

    @pl.when(i > j)
    def _():                                   # strictly below diagonal: transpose
        out_ref[0] = a_ref[0].T.astype(out_ref.dtype)

    @pl.when(i == j)
    def _():                                   # diagonal block: masked combine
        tm = out_ref.shape[1]
        blk = a_ref[0]
        r = lax.broadcasted_iota(jnp.int32, (tm, 1), 0)
        c = lax.broadcasted_iota(jnp.int32, (1, tm), 1)
        out = (jnp.where(c >= r, blk, jnp.float32(0.0))
               + jnp.where(r >= c, blk.T, jnp.float32(0.0)))
        out_ref[0] = out.astype(out_ref.dtype)


def rescaled_softmax(x, *, matmul_dtype=None, row_tile=None):
    """RescaledSoftmax forward (bias_mode=False). x: (B, N, F) -> (B, N, N).

    matmul_dtype: optionally jnp.bfloat16 for the Gram matmul (faster MXU path
      on v6e/v7x) when the caller's tolerance allows; default keeps f32 so the
      kernel matches the f32 reference tightly.
    row_tile: optional override of the automatically chosen row tile.
    """
    B, N, F = x.shape
    NP = _round_up(N, 128)      # lane-dense output / full MXU width
    FP = _round_up(F, 128)      # lane-dense input last dim

    x_p = jnp.pad(x, ((0, 0), (0, NP - N), (0, FP - F)))
    if matmul_dtype is not None:
        # Cast in the wrapper (not in-kernel): halves HBM traffic and the
        # resident (NP, FP) VMEM block, and removes per-step VPU cast passes.
        x_p = x_p.astype(matmul_dtype)
    x_bytes = x_p.dtype.itemsize
    f32 = 4

    budget = _vmem_budget_bytes()
    tm = row_tile if row_tile is not None else _pick_row_tile(NP, FP, x_bytes, budget)
    assert NP % tm == 0
    nt = NP // tm

    # ---- pass 1: row-tiled A_nonsym ---------------------------------------
    p1_need = _pass1_need_bytes(tm, NP, FP, x_bytes)
    p1_vmem = int(min(max(p1_need, 32 << 20), budget))
    p1_cost = pl.CostEstimate(
        flops=2 * B * NP * NP * FP,
        transcendentals=B * NP * NP,
        bytes_accessed=int(B * (NP * FP * x_bytes + NP * NP * f32)),
    )
    # On v7x megacore, split the batch axis (splitting the row-tile axis would
    # make both cores re-fetch the full (NP, FP) X_b); no-op on single-TC chips.
    p1_sem = ("parallel", "arbitrary") if B > 1 else ("parallel", "parallel")

    a_ns = pl.pallas_call(
        functools.partial(_rowwise_kernel, n_real=N),
        out_shape=jax.ShapeDtypeStruct((B, NP, NP), jnp.float32),
        grid_spec=pltpu.PrefetchScalarGridSpec(
            num_scalar_prefetch=0,
            grid=(B, nt),
            in_specs=[
                pl.BlockSpec((1, tm, FP), lambda b, i: (b, i, 0)),   # row tile
                pl.BlockSpec((1, NP, FP), lambda b, i: (b, 0, 0)),   # full X_b
            ],
            out_specs=pl.BlockSpec((1, tm, NP), lambda b, i: (b, i, 0)),
        ),
        compiler_params=pltpu.CompilerParams(
            dimension_semantics=p1_sem,
            vmem_limit_bytes=p1_vmem,
        ),
        cost_estimate=p1_cost,
    )(x_p, x_p)

    # ---- pass 2: triu + symmetrize, one read + one write per block --------
    p2_need = 2 * tm * tm * f32 + 2 * tm * tm * f32 + 4 * tm * tm * f32
    p2_vmem = int(min(max(p2_need, 32 << 20), budget))
    p2_cost = pl.CostEstimate(
        flops=B * NP * NP,
        transcendentals=0,
        bytes_accessed=int(2 * B * NP * NP * f32),
    )
    a_sym = pl.pallas_call(
        _symmetrize_kernel,
        out_shape=jax.ShapeDtypeStruct((B, NP, NP), x.dtype),
        grid_spec=pltpu.PrefetchScalarGridSpec(
            num_scalar_prefetch=0,
            grid=(B, nt, nt),
            in_specs=[
                pl.BlockSpec(
                    (1, tm, tm),
                    lambda b, i, j: (b, jnp.minimum(i, j), jnp.maximum(i, j))),
            ],
            out_specs=pl.BlockSpec((1, tm, tm), lambda b, i, j: (b, i, j)),
        ),
        compiler_params=pltpu.CompilerParams(
            dimension_semantics=("parallel", "parallel", "parallel"),
            vmem_limit_bytes=p2_vmem,
        ),
        cost_estimate=p2_cost,
    )(a_ns)

    return a_sym[:, :N, :N]


def _reference(x):
    """Pure-JAX reference mirroring the PyTorch forward exactly."""
    prod = jnp.einsum("bnf,bmf->bnm", x, x, precision="highest")
    n = prod.shape[-1]
    eye = jnp.eye(n, dtype=bool)
    zeroed = jnp.where(eye, 0.0, prod)
    sm = jax.nn.softmax(zeroed, axis=-1)
    sm_zero = jnp.where(eye, 0.0, sm)
    ma = jnp.max(sm_zero, axis=-1, keepdims=True)
    mi = jnp.min(sm_zero, axis=-1, keepdims=True)
    eps = jnp.finfo(x.dtype).eps
    a_nonsym = (sm_zero - mi) / (ma - mi + eps)
    atriu = jnp.triu(a_nonsym)
    return atriu + jnp.swapaxes(atriu, -1, -2)


if __name__ == "__main__":
    k1, k2 = jax.random.split(jax.random.PRNGKey(0))

    # Small default-config shape.
    B, N, F = 2, 16, 32
    X = jax.random.normal(k1, (B, N, F), dtype=jnp.float32)
    out = jax.block_until_ready(rescaled_softmax(X))
    ref = _reference(X)
    assert out.shape == (B, N, N)
    max_diff = float(jnp.max(jnp.abs(out - ref)))
    assert jnp.allclose(out, ref, atol=5e-5, rtol=5e-5), (
        "mismatch vs reference (small): max|diff|=%e" % max_diff)

    # Multi-row-tile + pass-2 copy/transpose branch coverage: N, F not
    # multiples of 128 and a forced tm=128 so NP=256 -> nt=2.
    B2, N2, F2 = 2, 200, 48
    X2 = jax.random.normal(k2, (B2, N2, F2), dtype=jnp.float32)
    out2 = jax.block_until_ready(rescaled_softmax(X2, row_tile=128))
    ref2 = _reference(X2)
    assert out2.shape == (B2, N2, N2)
    max_diff2 = float(jnp.max(jnp.abs(out2 - ref2)))
    assert jnp.allclose(out2, ref2, atol=5e-5, rtol=5e-5), (
        "mismatch vs reference (multi-tile): max|diff|=%e" % max_diff2)

    print("KERNEL_OK")
</pallas_src>

<mosaic_0001>
module attributes {stable_mosaic.version = 11 : i64} {
  func.func @_rowwise_kernel(%arg0: i32, %arg1: i32, %arg2: memref<1x128x128xf32, #tpu.memory_space<vmem>>, %arg3: memref<1x128x128xf32, #tpu.memory_space<vmem>>, %arg4: memref<1x128x128xf32, #tpu.memory_space<vmem>>) attributes {dimension_semantics = [#tpu.dimension_semantics<parallel>, #tpu.dimension_semantics<arbitrary>], iteration_bounds = array<i64: 2, 1>, scalar_prefetch = 0 : i64, scratch_operands = 0 : i64, tpu.core_type = #tpu.core_type<tc>, window_params = [{transform_indices = @transform_0, window_bounds = array<i64: 1, 128, 128>}, {transform_indices = @transform_1, window_bounds = array<i64: 1, 128, 128>}, {transform_indices = @transform_2, window_bounds = array<i64: 1, 128, 128>}]} {
    %c0 = arith.constant 0 : index
    %c0_0 = arith.constant 0 : index
    %c0_1 = arith.constant 0 : index
    %0 = vector.load %arg2[%c0, %c0_0, %c0_1] : memref<1x128x128xf32, #tpu.memory_space<vmem>>, vector<1x128x128xf32>
    %1 = vector.shape_cast %0 : vector<1x128x128xf32> to vector<128x128xf32>
    %c0_2 = arith.constant 0 : index
    %c0_3 = arith.constant 0 : index
    %c0_4 = arith.constant 0 : index
    %2 = vector.load %arg3[%c0_2, %c0_3, %c0_4] : memref<1x128x128xf32, #tpu.memory_space<vmem>>, vector<1x128x128xf32>
    %3 = vector.shape_cast %2 : vector<1x128x128xf32> to vector<128x128xf32>
    %cst = arith.constant dense<0.000000e+00> : vector<128x128xf32>
    %4 = tpu.matmul %1, %3, %cst {dimension_numbers = #tpu.dot_dimension_numbers<[1], [1], [0], [0], [0, 0, 1, 0], [], []>, precision = #tpu.contract_precision<fp32>} : vector<128x128xf32>, vector<128x128xf32>, vector<128x128xf32> -> vector<128x128xf32>
    %5 = tpu.iota {dimensions = array<i32: 0>} : vector<128x1xi32>
    %c128_i32 = arith.constant 128 : i32
    %6 = arith.muli %arg1, %c128_i32 : i32
    %7 = vector.broadcast %6 : i32 to vector<128x1xi32>
    %8 = arith.addi %5, %7 : vector<128x1xi32>
    %9 = tpu.iota {dimensions = array<i32: 1>} : vector<1x128xi32>
    %10 = vector.broadcast %8 : vector<128x1xi32> to vector<128x128xi32>
    %11 = vector.broadcast %9 : vector<1x128xi32> to vector<128x128xi32>
    %12 = arith.cmpi eq, %10, %11 : vector<128x128xi32>
    %cst_5 = arith.constant 0.000000e+00 : f32
    %13 = vector.broadcast %cst_5 : f32 to vector<128x128xf32>
    %14 = arith.select %12, %13, %4 : vector<128x128xi1>, vector<128x128xf32>
    %c16_i32 = arith.constant 16 : i32
    %15 = vector.broadcast %c16_i32 : i32 to vector<1x128xi32>
    %16 = arith.cmpi sge, %9, %15 : vector<1x128xi32>
    %cst_6 = arith.constant -1.000000e+30 : f32
    %17 = vector.shape_cast %16 : vector<1x128xi1> to vector<1x128xi1>
    %18 = vector.broadcast %17 : vector<1x128xi1> to vector<128x128xi1>
    %19 = vector.broadcast %cst_6 : f32 to vector<128x128xf32>
    %20 = arith.select %18, %19, %14 : vector<128x128xi1>, vector<128x128xf32>
    %cst_7 = arith.constant dense<0xFF800000> : vector<128xf32>
    %21 = vector.multi_reduction <maximumf>, %20, %cst_7 [1] : vector<128x128xf32> to vector<128xf32>
    %22 = vector.shape_cast %21 : vector<128xf32> to vector<128x1xf32>
    %23 = vector.broadcast %22 : vector<128x1xf32> to vector<128x128xf32>
    %24 = arith.subf %20, %23 : vector<128x128xf32>
    %25 = math.exp %24 : vector<128x128xf32>
    %cst_8 = arith.constant 0.000000e+00 : f32
    %26 = vector.broadcast %cst_8 : f32 to vector<128x128xf32>
    %27 = arith.select %12, %26, %25 : vector<128x128xi1>, vector<128x128xf32>
    %cst_9 = arith.constant dense<0.000000e+00> : vector<128xf32>
    %28 = vector.multi_reduction <add>, %25, %cst_9 [1] : vector<128x128xf32> to vector<128xf32>
    %29 = vector.shape_cast %28 : vector<128xf32> to vector<128x1xf32>
    %cst_10 = arith.constant 1.000000e+00 : f32
    %30 = vector.broadcast %cst_10 : f32 to vector<128x1xf32>
    %31 = arith.divf %30, %29 : vector<128x1xf32>
    %cst_11 = arith.constant dense<0xFF800000> : vector<128xf32>
    %32 = vector.multi_reduction <maximumf>, %27, %cst_11 [1] : vector<128x128xf32> to vector<128xf32>
    %33 = vector.shape_cast %32 : vector<128xf32> to vector<128x1xf32>
    %34 = arith.mulf %33, %31 : vector<128x1xf32>
    %cst_12 = arith.constant 1.1920929E-7 : f32
    %35 = vector.broadcast %cst_12 : f32 to vector<128x1xf32>
    %36 = arith.addf %34, %35 : vector<128x1xf32>
    %37 = arith.divf %31, %36 : vector<128x1xf32>
    %38 = vector.broadcast %37 : vector<128x1xf32> to vector<128x128xf32>
    %39 = arith.mulf %27, %38 : vector<128x128xf32>
    %c0_13 = arith.constant 0 : index
    %c0_14 = arith.constant 0 : index
    %c0_15 = arith.constant 0 : index
    %40 = vector.load %arg4[%c0_13, %c0_14, %c0_15] : memref<1x128x128xf32, #tpu.memory_space<vmem>>, vector<1x128x128xf32>
    %41 = vector.shape_cast %40 : vector<1x128x128xf32> to vector<128x128xf32>
    %42 = vector.shape_cast %39 : vector<128x128xf32> to vector<1x128x128xf32>
    tpu.vector_store %arg4[%c0_13, %c0_14, %c0_15], %42 {strides = array<i32>} : memref<1x128x128xf32, #tpu.memory_space<vmem>>, vector<1x128x128xf32>,
    return
  }
  func.func @transform_0(%arg0: i32, %arg1: i32) -> (i32, i32, i32) {
    %c0_i32 = arith.constant 0 : i32
    %c0_i32_0 = arith.constant 0 : i32
    return %arg0, %arg1, %c0_i32 : i32, i32, i32
  }
  func.func @transform_1(%arg0: i32, %arg1: i32) -> (i32, i32, i32) {
    %c0_i32 = arith.constant 0 : i32
    %c0_i32_0 = arith.constant 0 : i32
    %c0_i32_1 = arith.constant 0 : i32
    return %arg0, %c0_i32, %c0_i32_0 : i32, i32, i32
  }
  func.func @transform_2(%arg0: i32, %arg1: i32) -> (i32, i32, i32) {
    %c0_i32 = arith.constant 0 : i32
    %c0_i32_0 = arith.constant 0 : i32
    return %arg0, %arg1, %c0_i32 : i32, i32, i32
  }
}

</mosaic_0001>

<llo_original>
// kernel: tpu_custom_call.1
$region0: #{tpu_custom_call.1}
  #allocation0 [shape = 'u32[]', space=smem, size = 0x4, offset = 0x4, fixed_abs, tag = 'smem constant byte address 0x4 - core index']
  #allocation1 [shape = 'u32[144,128]{1,0:T(1,128)}', space=vmem, size = 0x12000, scoped, tag = 'internal scratch']
  %s0 = inlined_call_operand.hbm [shape: f32[2,128,128], index: 0, kind: input, shape index: {}]
  %s1 = inlined_call_operand.hbm [shape: f32[2,128,128], index: 1, kind: input, shape index: {}]
  %s2 = inlined_call_operand.hbm [shape: f32[2,128,128], index: 2, kind: output, shape index: {}]
  %s3 = sld [smem:[#allocation0]]
  $region49: #{tpu_custom_call.1} parent=0
    _
  %s5 = ssub.s32 1, %s3
  %s6 = scalar_select 0, %s5, %s3
  $region1: #{tpu_custom_call.1} parent=0
    #allocation2 [shape = 'u8[131072]{0}', space=vmem, size = 0x20000, scoped, tag = 'input window, operand 0']
    #allocation3 [shape = 's32[2]{0}', space=sflag, size = 0x8, scoped, tag = 'scoped memory for tpu_custom_call.1']
    #allocation4 [shape = 's32[2]{0}', space=sflag, size = 0x8, scoped, tag = 'scoped memory for tpu_custom_call.1']
    #allocation5 [shape = 'u8[131072]{0}', space=vmem, size = 0x20000, scoped, tag = 'input window, operand 1']
    #allocation6 [shape = 's32[2]{0}', space=sflag, size = 0x8, scoped, tag = 'scoped memory for tpu_custom_call.1']
    #allocation7 [shape = 'u8[131072]{0}', space=vmem, size = 0x20000, scoped, tag = 'output window, operand 0']
    %7 = vsyncpa [#allocation3], 0
    %s8 = scalar_lea.sflag [#allocation3], 1
    %9 = vsyncpa %s8, 0
    %10 = vsyncpa [#allocation6], 0
    %s11 = scalar_lea.sflag [#allocation6], 1
    %12 = vsyncpa %s11, 0
    %13 = vsyncpa [#allocation4], 0
    %s14 = scalar_lea.sflag [#allocation4], 1
    %15 = vsyncpa %s14, 0
    loop: start=0, step=1, limit=4
    $region2: #{tpu_custom_call.1} parent=1 // loop_pre_header
      _
    $region3: #{tpu_custom_call.1} parent=1 // loop_header
      %s17 = sphi 0, %s21
      %p18 = scmp.ge.s32.totalorder %s17, 4
      %s24 = sphi 0, %s36
      %s25 = sphi 0, %s32
      %s26 = sphi 0, %s24
      %s27 = sphi 0, %s25
      %s28 = sphi 0, %s26
      %s29 = sphi 0, %s27
      %s41 = sphi 0, %s43
      %s44 = sphi 0, %s41
      %s45 = sphi 0, %s44
      %s61 = sphi 0, %s45
      %s67 = sphi 0, %s69
      %s70 = sphi 0, %s67
      %s71 = sphi 0, %s70
      %s87 = sphi 0, %s71
      %s95 = sphi 0, %s97
      %s98 = sphi 0, %s95
      %s99 = sphi 0, %s98
      %s115 = sphi 0, %s99
    $region4: #{tpu_custom_call.1} parent=1 // loop_header_branch
      %20 = sbr.rel (%p18) target = $region8
    $region5: #{tpu_custom_call.1} parent=1 // loop_body
      %s22 = ssub.s32 %s17, 1
      %s23 = ssub.s32 %s17, 2
      %s30 = sadd.s32 1, %s25
      %p31 = scmp.ge.s32.totalorder %s30, 1
      %s32 = scalar_select %p31, 0, %s30
      %s33 = sadd.s32 1, %s24
      %s34 = scalar_select %p31, %s33, %s24
      %p35 = scmp.ge.s32.totalorder %s34, 2
      %s36 = scalar_select %p35, 0, %s34
      %s37 = ssub.s32 %s24, %s36
      %s38 = ssub.s32 %s25, %s32
      %s39 = sor.u32 %s37, %s38
      %p40 = scmp.eq.s32.totalorder %s39, 0
      %s42 = sadd.s32 %s41, 1
      %s43 = scalar_select %p40, %s41, %s42
      %p46 = pneg %p40
      %p47 = scmp.eq.s32.totalorder %s17, 1
      %p48 = por %p46, %p47
      %p49 = scmp.ne.s32.totalorder %s41, %s44
      %p50 = scmp.eq.s32.totalorder %s17, 0
      %p51 = por %p49, %p50
      %p52 = scmp.ne.s32.totalorder %s41, %s44
      %p53 = scmp.eq.s32.totalorder %s22, 1
      %p54 = por %p52, %p53
      %p55 = scmp.ne.s32.totalorder %s44, %s45
      %p56 = scmp.eq.s32.totalorder %s22, 0
      %p57 = por %p55, %p56
      %p58 = scmp.ne.s32.totalorder %s44, %s45
      %p59 = scmp.eq.s32.totalorder %s23, 1
      %p60 = por %p58, %p59
      %p62 = scmp.ne.s32.totalorder %s45, %s61
      %p63 = scmp.eq.s32.totalorder %s23, 0
      %p64 = por %p62, %p63
      %s65 = ssub.s32 %s24, %s36
      %p66 = scmp.eq.s32.totalorder %s65, 0
      %s68 = sadd.s32 %s67, 1
      %s69 = scalar_select %p66, %s67, %s68
      %p72 = pneg %p66
      %p73 = scmp.eq.s32.totalorder %s17, 1
      %p74 = por %p72, %p73
      %p75 = scmp.ne.s32.totalorder %s67, %s70
      %p76 = scmp.eq.s32.totalorder %s17, 0
      %p77 = por %p75, %p76
      %p78 = scmp.ne.s32.totalorder %s67, %s70
      %p79 = scmp.eq.s32.totalorder %s22, 1
      %p80 = por %p78, %p79
      %p81 = scmp.ne.s32.totalorder %s70, %s71
      %p82 = scmp.eq.s32.totalorder %s22, 0
      %p83 = por %p81, %p82
      %p84 = scmp.ne.s32.totalorder %s70, %s71
      %p85 = scmp.eq.s32.totalorder %s23, 1
      %p86 = por %p84, %p85
      %p88 = scmp.ne.s32.totalorder %s71, %s87
      %p89 = scmp.eq.s32.totalorder %s23, 0
      %p90 = por %p88, %p89
      %s91 = ssub.s32 %s24, %s36
      %s92 = ssub.s32 %s25, %s32
      %s93 = sor.u32 %s91, %s92
      %p94 = scmp.eq.s32.totalorder %s93, 0
      %s96 = sadd.s32 %s95, 1
      %s97 = scalar_select %p94, %s95, %s96
      %p100 = pneg %p94
      %p101 = scmp.eq.s32.totalorder %s17, 1
      %p102 = por %p100, %p101
      %p103 = scmp.ne.s32.totalorder %s95, %s98
      %p104 = scmp.eq.s32.totalorder %s17, 0
      %p105 = por %p103, %p104
      %p106 = scmp.ne.s32.totalorder %s95, %s98
      %p107 = scmp.eq.s32.totalorder %s22, 1
      %p108 = por %p106, %p107
      %p109 = scmp.ne.s32.totalorder %s98, %s99
      %p110 = scmp.eq.s32.totalorder %s22, 0
      %p111 = por %p109, %p110
      %p112 = scmp.ne.s32.totalorder %s98, %s99
      %p113 = scmp.eq.s32.totalorder %s23, 1
      %p114 = por %p112, %p113
      %p116 = scmp.ne.s32.totalorder %s99, %s115
      %p117 = scmp.eq.s32.totalorder %s23, 0
      %p118 = por %p116, %p117
      %p119 = scmp.le.s32.totalorder 1, %s17
      %p120 = scmp.lt.s32.totalorder %s17, 3
      %p121 = pnand %p119, %p120
      %p122 = pneg %p121
      // Predicated region
      $region9: #{tpu_custom_call.1} parent=5 // pred_check
        _
      $region10: #{tpu_custom_call.1} parent=5 // pred_check_branch
        %124 = sbr.rel (%p121) target = $region12
      $region11: #{tpu_custom_call.1} parent=5 // pred_region
        %s125 = ssub.s32 %s17, 1
      $region12: #{tpu_custom_call.1} parent=5 // pred_fallthru
        _
      %p126 = scmp.lt.s32.totalorder %s17, 2
      // Predicated region
      $region13: #{tpu_custom_call.1} parent=5 // pred_check
        %p127 = pneg %p126
      $region14: #{tpu_custom_call.1} parent=5 // pred_check_branch
        %129 = sbr.rel (%p127) target = $region16
      $region15: #{tpu_custom_call.1} parent=5 // pred_region
        // Predicated region
        $region17: #{tpu_custom_call.1} parent=15 // pred_check
          %p130 = pneg %p51
        $region18: #{tpu_custom_call.1} parent=15 // pred_check_branch
          %132 = sbr.rel (%p130) target = $region20
        $region19: #{tpu_custom_call.1} parent=15 // pred_region
          %s133 = sand.u32 %s41, 1
          %s134 = scalar_lea.sflag [#allocation3], %s133
          %s135 = sand.u32 %s41, 1
          %s136 = smul.addr %s135, 128
          %s137 = scalar_lea.vmem [#allocation2], %s136
          %s138 = smul.u32 16, %s25
          %s140 = ssub.s32 2048, 2048
          %141 = vsyncadd %s134, %s140
          %s142 = smul.addr %s24, 16
          %s143 = sadd.s32 %s138, %s142
          %s144 = smul.addr %s143, 128
          %s145 = scalar_lea.hbm %s0, %s144
          %s146 = sshll.u32 %s137, 4
          %s147 = int_to_ptr.vmem [resolvable:$true] %s146
          %152 = dma.hbm_to_vmem [thread:$0]  %s145, 2048, %s147, %s134, 128, 128, 8
        $region20: #{tpu_custom_call.1} parent=15 // pred_fallthru
          _
        // Predicated region
        $region21: #{tpu_custom_call.1} parent=15 // pred_check
          %p153 = pneg %p77
        $region22: #{tpu_custom_call.1} parent=15 // pred_check_branch
          %155 = sbr.rel (%p153) target = $region24
        $region23: #{tpu_custom_call.1} parent=15 // pred_region
          %s156 = sand.u32 %s67, 1
          %s157 = scalar_lea.sflag [#allocation6], %s156
          %s158 = sand.u32 %s67, 1
          %s159 = smul.addr %s158, 128
          %s160 = scalar_lea.vmem [#allocation5], %s159
          %s162 = ssub.s32 2048, 2048
          %163 = vsyncadd %s157, %s162
          %s164 = smul.addr %s24, 16
          %s165 = smul.addr %s164, 128
          %s166 = scalar_lea.hbm %s1, %s165
          %s167 = sshll.u32 %s160, 4
          %s168 = int_to_ptr.vmem [resolvable:$true] %s167
          %173 = dma.hbm_to_vmem [thread:$0]  %s166, 2048, %s168, %s157, 128, 128, 8
        $region24: #{tpu_custom_call.1} parent=15 // pred_fallthru
          _
      $region16: #{tpu_custom_call.1} parent=5 // pred_fallthru
        _
      %p174 = scmp.le.s32.totalorder 1, %s17
      %p175 = scmp.lt.s32.totalorder %s17, 3
      %p176 = pnand %p174, %p175
      %p177 = pneg %p176
      // Predicated region
      $region25: #{tpu_custom_call.1} parent=5 // pred_check
        _
      $region26: #{tpu_custom_call.1} parent=5 // pred_check_branch
        %179 = sbr.rel (%p176) target = $region28
      $region27: #{tpu_custom_call.1} parent=5 // pred_region
        %s180 = ssub.s32 %s17, 1
        %s181 = sand.u32 %s44, 1
        %s182 = scalar_lea.sflag [#allocation3], %s181
        %s183 = sand.u32 %s44, 1
        %s184 = smul.addr %s183, 128
        %s185 = scalar_lea.vmem [#allocation2], %s184
        // Predicated region
        $region29: #{tpu_custom_call.1} parent=27 // pred_check
          %p186 = pneg %p57
        $region30: #{tpu_custom_call.1} parent=27 // pred_check_branch
          %188 = sbr.rel (%p186) target = $region32
        $region31: #{tpu_custom_call.1} parent=27 // pred_region
          %189 = dma.done %s182, 2048
        $region32: #{tpu_custom_call.1} parent=27 // pred_fallthru
          _
        %s190 = sand.u32 %s70, 1
        %s191 = scalar_lea.sflag [#allocation6], %s190
        %s192 = sand.u32 %s70, 1
        %s193 = smul.addr %s192, 128
        %s194 = scalar_lea.vmem [#allocation5], %s193
        // Predicated region
        $region33: #{tpu_custom_call.1} parent=27 // pred_check
          %p195 = pneg %p83
        $region34: #{tpu_custom_call.1} parent=27 // pred_check_branch
          %197 = sbr.rel (%p195) target = $region36
        $region35: #{tpu_custom_call.1} parent=27 // pred_region
          %198 = dma.done %s191, 2048
        $region36: #{tpu_custom_call.1} parent=27 // pred_fallthru
          _
        %s199 = sand.u32 %s44, 1
        %s200 = scalar_lea.sflag [#allocation3], %s199
        %s201 = sand.u32 %s44, 1
        %s202 = smul.addr %s201, 128
        %s203 = scalar_lea.vmem [#allocation2], %s202
        %p204 = pneg %p57
        %p205 = pneg %p54
        %s206 = sand.u32 %s70, 1
        %s207 = scalar_lea.sflag [#allocation6], %s206
        %s208 = sand.u32 %s70, 1
        %s209 = smul.addr %s208, 128
        %s210 = scalar_lea.vmem [#allocation5], %s209
        %p211 = pneg %p83
        %p212 = pneg %p80
        %p213 = pneg %p111
        %p214 = pneg %p108
        %s215 = sand.u32 %s98, 1
        %s216 = scalar_lea.sflag [#allocation4], %s215
        %s217 = sand.u32 %s98, 1
        %s218 = smul.addr %s217, 128
        %s219 = scalar_lea.vmem [#allocation7], %s218
        %s220 = smul.u32 16, %s27
        %s221 = smul.u32 16, %s27
        %v222 = vld [vmem:[%s185] sm:$0xff]
        %v223 = vld [vmem:[%s185 + $0x8] sm:$0xff]
        %v224 = vld [vmem:[%s185 + $0x10] sm:$0xff]
        %v225 = vld [vmem:[%s185 + $0x18] sm:$0xff]
        %v226 = vld [vmem:[%s185 + $0x20] sm:$0xff]
        %v227 = vld [vmem:[%s185 + $0x28] sm:$0xff]
        %v228 = vld [vmem:[%s185 + $0x30] sm:$0xff]
        %v229 = vld [vmem:[%s185 + $0x38] sm:$0xff]
        %v230 = vld [vmem:[%s185 + $0x40] sm:$0xff]
        %v231 = vld [vmem:[%s185 + $0x48] sm:$0xff]
        %v232 = vld [vmem:[%s185 + $0x50] sm:$0xff]
        %v233 = vld [vmem:[%s185 + $0x58] sm:$0xff]
        %v234 = vld [vmem:[%s185 + $0x60] sm:$0xff]
        %v235 = vld [vmem:[%s185 + $0x68] sm:$0xff]
        %v236 = vld [vmem:[%s185 + $0x70] sm:$0xff]
        %v237 = vld [vmem:[%s185 + $0x78] sm:$0xff]
        %v238 = vld [vmem:[%s194] sm:$0xff]
        %v239 = vld [vmem:[%s194 + $0x8] sm:$0xff]
        %v240 = vld [vmem:[%s194 + $0x10] sm:$0xff]
        %v241 = vld [vmem:[%s194 + $0x18] sm:$0xff]
        %v242 = vld [vmem:[%s194 + $0x20] sm:$0xff]
        %v243 = vld [vmem:[%s194 + $0x28] sm:$0xff]
        %v244 = vld [vmem:[%s194 + $0x30] sm:$0xff]
        %v245 = vld [vmem:[%s194 + $0x38] sm:$0xff]
        %v246 = vld [vmem:[%s194 + $0x40] sm:$0xff]
        %v247 = vld [vmem:[%s194 + $0x48] sm:$0xff]
        %v248 = vld [vmem:[%s194 + $0x50] sm:$0xff]
        %v249 = vld [vmem:[%s194 + $0x58] sm:$0xff]
        %v250 = vld [vmem:[%s194 + $0x60] sm:$0xff]
        %v251 = vld [vmem:[%s194 + $0x68] sm:$0xff]
        %v252 = vld [vmem:[%s194 + $0x70] sm:$0xff]
        %v253 = vld [vmem:[%s194 + $0x78] sm:$0xff]
        %254 = vmatprep.subr.mxu0 0.0
        %v255 = vand.u32 %v253, 4294901760
        %256 = vmatpush1.xpose.msra.mxu0 %v255
        %257 = vmatprep.subr.mxu0 0.0
        %v258 = vand.u32 %v252, 4294901760
        %259 = vmatpush1.xpose.msra.mxu0 %v258
        %260 = vmatprep.subr.mxu0 0.0
        %v261 = vand.u32 %v251, 4294901760
        %262 = vmatpush1.xpose.msra.mxu0 %v261
        %263 = vmatprep.subr.mxu0 0.0
        %v264 = vand.u32 %v250, 4294901760
        %265 = vmatpush1.xpose.msra.mxu0 %v264
        %266 = vmatprep.subr.mxu0 0.0
        %v267 = vand.u32 %v249, 4294901760
        %268 = vmatpush1.xpose.msra.mxu0 %v267
        %269 = vmatprep.subr.mxu0 0.0
        %v270 = vand.u32 %v248, 4294901760
        %271 = vmatpush1.xpose.msra.mxu0 %v270
        %272 = vmatprep.subr.mxu0 0.0
        %v273 = vand.u32 %v247, 4294901760
        %274 = vmatpush1.xpose.msra.mxu0 %v273
        %275 = vmatprep.subr.mxu0 0.0
        %v276 = vand.u32 %v246, 4294901760
        %277 = vmatpush1.xpose.msra.mxu0 %v276
        %278 = vmatprep.subr.mxu0 0.0
        %v279 = vand.u32 %v245, 4294901760
        %280 = vmatpush1.xpose.msra.mxu0 %v279
        %281 = vmatprep.subr.mxu0 0.0
        %v282 = vand.u32 %v244, 4294901760
        %283 = vmatpush1.xpose.msra.mxu0 %v282
        %284 = vmatprep.subr.mxu0 0.0
        %v285 = vand.u32 %v243, 4294901760
        %286 = vmatpush1.xpose.msra.mxu0 %v285
        %287 = vmatprep.subr.mxu0 0.0
        %v288 = vand.u32 %v242, 4294901760
        %289 = vmatpush1.xpose.msra.mxu0 %v288
        %290 = vmatprep.subr.mxu0 0.0
        %v291 = vand.u32 %v241, 4294901760
        %292 = vmatpush1.xpose.msra.mxu0 %v291
        %293 = vmatprep.subr.mxu0 0.0
        %v294 = vand.u32 %v240, 4294901760
        %295 = vmatpush1.xpose.msra.mxu0 %v294
        %296 = vmatprep.subr.mxu0 0.0
        %v297 = vand.u32 %v239, 4294901760
        %298 = vmatpush1.xpose.msra.mxu0 %v297
        %299 = vmatprep.subr.mxu0 0.0
        %v300 = vand.u32 %v238, 4294901760
        %301 = vmatpush1.xpose.msra.mxu0 %v300
        %302 = vmatprep.subr.mxu0 0.0
        %303 = vmatpush2.xpose.msra.mxu0 0.0
        %304 = vmatprep.subr.mxu0 0.0
        %305 = vmatpush2.xpose.msra.mxu0 0.0
        %306 = vmatprep.subr.mxu0 0.0
        %307 = vmatpush2.xpose.msra.mxu0 0.0
        %308 = vmatprep.subr.mxu0 0.0
        %309 = vmatpush2.xpose.msra.mxu0 0.0
        %310 = vmatprep.subr.mxu0 0.0
        %311 = vmatpush2.xpose.msra.mxu0 0.0
        %312 = vmatprep.subr.mxu0 0.0
        %313 = vmatpush2.xpose.msra.mxu0 0.0
        %314 = vmatprep.subr.mxu0 0.0
        %315 = vmatpush2.xpose.msra.mxu0 0.0
        %316 = vmatprep.subr.mxu0 0.0
        %317 = vmatpush2.xpose.msra.mxu0 0.0
        %318 = vmatprep.subr.mxu0 0.0
        %319 = vmatpush2.xpose.msra.mxu0 0.0
        %320 = vmatprep.subr.mxu0 0.0
        %321 = vmatpush2.xpose.msra.mxu0 0.0
        %322 = vmatprep.subr.mxu0 0.0
        %323 = vmatpush2.xpose.msra.mxu0 0.0
        %324 = vmatprep.subr.mxu0 0.0
        %325 = vmatpush2.xpose.msra.mxu0 0.0
        %326 = vmatprep.subr.mxu0 0.0
        %327 = vmatpush2.xpose.msra.mxu0 0.0
        %328 = vmatprep.subr.mxu0 0.0
        %329 = vmatpush2.xpose.msra.mxu0 0.0
        %330 = vmatprep.subr.mxu0 0.0
        %331 = vmatpush2.xpose.msra.mxu0 0.0
        %332 = vmatprep.subr.mxu0 0.0
        %333 = vmatpush2.xpose.msra.mxu0 0.0
        %334 = vmatprep.mubr.f32.mxu0 0.0
        %v335 = vand.u32 %v222, 4294901760
        %v336 = vsub.f32 %v222, %v335
        %v337 = vand.u32 %v336, 4294901760
        %v338 = vsub.f32 %v336, %v337
        %v339 = vand.u32 %v338, 4294901760
        %340 = vmatmul.mubr.f32.gmra.mxu0 %v339
        %v341 = vpop.f32.mrf.mxu0
        %v342 = vadd.f32 0.0, %v341
        %v343 = vpop.f32.mrf.mxu0
        %344 = vmatprep.mubr.f32.mxu0 0.0
        %v345 = vand.u32 %v223, 4294901760
        %v346 = vsub.f32 %v223, %v345
        %v347 = vand.u32 %v346, 4294901760
        %v348 = vsub.f32 %v346, %v347
        %v349 = vand.u32 %v348, 4294901760
        %350 = vmatmul.mubr.f32.gmra.mxu0 %v349
        %v351 = vpop.f32.mrf.mxu0
        %v352 = vadd.f32 0.0, %v351
        %v353 = vpop.f32.mrf.mxu0
        %354 = vmatprep.mubr.f32.mxu0 0.0
        %v355 = vand.u32 %v224, 4294901760
        %v356 = vsub.f32 %v224, %v355
        %v357 = vand.u32 %v356, 4294901760
        %v358 = vsub.f32 %v356, %v357
        %v359 = vand.u32 %v358, 4294901760
        %360 = vmatmul.mubr.f32.gmra.mxu0 %v359
        %v361 = vpop.f32.mrf.mxu0
        %v362 = vadd.f32 0.0, %v361
        %v363 = vpop.f32.mrf.mxu0
        %364 = vmatprep.mubr.f32.mxu0 0.0
        %v365 = vand.u32 %v225, 4294901760
        %v366 = vsub.f32 %v225, %v365
        %v367 = vand.u32 %v366, 4294901760
        %v368 = vsub.f32 %v366, %v367
        %v369 = vand.u32 %v368, 4294901760
        %370 = vmatmul.mubr.f32.gmra.mxu0 %v369
        %v371 = vpop.f32.mrf.mxu0
        %v372 = vadd.f32 0.0, %v371
        %v373 = vpop.f32.mrf.mxu0
        %374 = vmatprep.mubr.f32.mxu0 0.0
        %v375 = vand.u32 %v226, 4294901760
        %v376 = vsub.f32 %v226, %v375
        %v377 = vand.u32 %v376, 4294901760
        %v378 = vsub.f32 %v376, %v377
        %v379 = vand.u32 %v378, 4294901760
        %380 = vmatmul.mubr.f32.gmra.mxu0 %v379
        %v381 = vpop.f32.mrf.mxu0
        %v382 = vadd.f32 0.0, %v381
        %v383 = vpop.f32.mrf.mxu0
        %384 = vmatprep.mubr.f32.mxu0 0.0
        %v385 = vand.u32 %v227, 4294901760
        %v386 = vsub.f32 %v227, %v385
        %v387 = vand.u32 %v386, 4294901760
        %v388 = vsub.f32 %v386, %v387
        %v389 = vand.u32 %v388, 4294901760
        %390 = vmatmul.mubr.f32.gmra.mxu0 %v389
        %v391 = vpop.f32.mrf.mxu0
        %v392 = vadd.f32 0.0, %v391
        %v393 = vpop.f32.mrf.mxu0
        %394 = vmatprep.mubr.f32.mxu0 0.0
        %v395 = vand.u32 %v228, 4294901760
        %v396 = vsub.f32 %v228, %v395
        %v397 = vand.u32 %v396, 4294901760
        %v398 = vsub.f32 %v396, %v397
        %v399 = vand.u32 %v398, 4294901760
        %400 = vmatmul.mubr.f32.gmra.mxu0 %v399
        %v401 = vpop.f32.mrf.mxu0
        %v402 = vadd.f32 0.0, %v401
        %v403 = vpop.f32.mrf.mxu0
        %404 = vmatprep.mubr.f32.mxu0 0.0
        %v405 = vand.u32 %v229, 4294901760
        %v406 = vsub.f32 %v229, %v405
        %v407 = vand.u32 %v406, 4294901760
        %v408 = vsub.f32 %v406, %v407
        %v409 = vand.u32 %v408, 4294901760
        %410 = vmatmul.mubr.f32.gmra.mxu0 %v409
        %v411 = vpop.f32.mrf.mxu0
        %v412 = vadd.f32 0.0, %v411
        %v413 = vpop.f32.mrf.mxu0
        %414 = vmatprep.mubr.f32.mxu0 0.0
        %v415 = vand.u32 %v230, 4294901760
        %v416 = vsub.f32 %v230, %v415
        %v417 = vand.u32 %v416, 4294901760
        %v418 = vsub.f32 %v416, %v417
        %v419 = vand.u32 %v418, 4294901760
        %420 = vmatmul.mubr.f32.gmra.mxu0 %v419
        %v421 = vpop.f32.mrf.mxu0
        %v422 = vadd.f32 0.0, %v421
        %v423 = vpop.f32.mrf.mxu0
        %424 = vmatprep.mubr.f32.mxu0 0.0
        %v425 = vand.u32 %v231, 4294901760
        %v426 = vsub.f32 %v231, %v425
        %v427 = vand.u32 %v426, 4294901760
        %v428 = vsub.f32 %v426, %v427
        %v429 = vand.u32 %v428, 4294901760
        %430 = vmatmul.mubr.f32.gmra.mxu0 %v429
        %v431 = vpop.f32.mrf.mxu0
        %v432 = vadd.f32 0.0, %v431
        %v433 = vpop.f32.mrf.mxu0
        %434 = vmatprep.mubr.f32.mxu0 0.0
        %v435 = vand.u32 %v232, 4294901760
        %v436 = vsub.f32 %v232, %v435
        %v437 = vand.u32 %v436, 4294901760
        %v438 = vsub.f32 %v436, %v437
        %v439 = vand.u32 %v438, 4294901760
        %440 = vmatmul.mubr.f32.gmra.mxu0 %v439
        %v441 = vpop.f32.mrf.mxu0
        %v442 = vadd.f32 0.0, %v441
        %v443 = vpop.f32.mrf.mxu0
        %444 = vmatprep.mubr.f32.mxu0 0.0
        %v445 = vand.u32 %v233, 4294901760
        %v446 = vsub.f32 %v233, %v445
        %v447 = vand.u32 %v446, 4294901760
        %v448 = vsub.f32 %v446, %v447
        %v449 = vand.u32 %v448, 4294901760
        %450 = vmatmul.mubr.f32.gmra.mxu0 %v449
        %v451 = vpop.f32.mrf.mxu0
        %v452 = vadd.f32 0.0, %v451
        %v453 = vpop.f32.mrf.mxu0
        %454 = vmatprep.mubr.f32.mxu0 0.0
        %v455 = vand.u32 %v234, 4294901760
        %v456 = vsub.f32 %v234, %v455
        %v457 = vand.u32 %v456, 4294901760
        %v458 = vsub.f32 %v456, %v457
        %v459 = vand.u32 %v458, 4294901760
        %460 = vmatmul.mubr.f32.gmra.mxu0 %v459
        %v461 = vpop.f32.mrf.mxu0
        %v462 = vadd.f32 0.0, %v461
        %v463 = vpop.f32.mrf.mxu0
        %464 = vmatprep.mubr.f32.mxu0 0.0
        %v465 = vand.u32 %v235, 4294901760
        %v466 = vsub.f32 %v235, %v465
        %v467 = vand.u32 %v466, 4294901760
        %v468 = vsub.f32 %v466, %v467
        %v469 = vand.u32 %v468, 4294901760
        %470 = vmatmul.mubr.f32.gmra.mxu0 %v469
        %v471 = vpop.f32.mrf.mxu0
        %v472 = vadd.f32 0.0, %v471
        %v473 = vpop.f32.mrf.mxu0
        %474 = vmatprep.mubr.f32.mxu0 0.0
        %v475 = vand.u32 %v236, 4294901760
        %v476 = vsub.f32 %v236, %v475
        %v477 = vand.u32 %v476, 4294901760
        %v478 = vsub.f32 %v476, %v477
        %v479 = vand.u32 %v478, 4294901760
        %480 = vmatmul.mubr.f32.gmra.mxu0 %v479
        %v481 = vpop.f32.mrf.mxu0
        %v482 = vadd.f32 0.0, %v481
        %v483 = vpop.f32.mrf.mxu0
        %484 = vmatprep.mubr.f32.mxu0 0.0
        %v485 = vand.u32 %v237, 4294901760
        %v486 = vsub.f32 %v237, %v485
        %v487 = vand.u32 %v486, 4294901760
        %v488 = vsub.f32 %v486, %v487
        %v489 = vand.u32 %v488, 4294901760
        %490 = vmatmul.mubr.f32.gmra.mxu0 %v489
        %v491 = vpop.f32.mrf.mxu0
        %v492 = vadd.f32 0.0, %v491
        %v493 = vpop.f32.mrf.mxu0
        %494 = vdwg.mxu0
        %495 = vmatprep.subr.mxu0 0.0
        %v496 = vand.u32 %v253, 4294901760
        %v497 = vsub.f32 %v253, %v496
        %v498 = vand.u32 %v497, 4294901760
        %v499 = vsub.f32 %v497, %v498
        %v500 = vand.u32 %v499, 4294901760
        %501 = vmatpush1.xpose.msra.mxu0 %v500
        %502 = vmatprep.subr.mxu0 0.0
        %v503 = vand.u32 %v252, 4294901760
        %v504 = vsub.f32 %v252, %v503
        %v505 = vand.u32 %v504, 4294901760
        %v506 = vsub.f32 %v504, %v505
        %v507 = vand.u32 %v506, 4294901760
        %508 = vmatpush1.xpose.msra.mxu0 %v507
        %509 = vmatprep.subr.mxu0 0.0
        %v510 = vand.u32 %v251, 4294901760
        %v511 = vsub.f32 %v251, %v510
        %v512 = vand.u32 %v511, 4294901760
        %v513 = vsub.f32 %v511, %v512
        %v514 = vand.u32 %v513, 4294901760
        %515 = vmatpush1.xpose.msra.mxu0 %v514
        %516 = vmatprep.subr.mxu0 0.0
        %v517 = vand.u32 %v250, 4294901760
        %v518 = vsub.f32 %v250, %v517
        %v519 = vand.u32 %v518, 4294901760
        %v520 = vsub.f32 %v518, %v519
        %v521 = vand.u32 %v520, 4294901760
        %522 = vmatpush1.xpose.msra.mxu0 %v521
        %523 = vmatprep.subr.mxu0 0.0
        %v524 = vand.u32 %v249, 4294901760
        %v525 = vsub.f32 %v249, %v524
        %v526 = vand.u32 %v525, 4294901760
        %v527 = vsub.f32 %v525, %v526
        %v528 = vand.u32 %v527, 4294901760
        %529 = vmatpush1.xpose.msra.mxu0 %v528
        %530 = vmatprep.subr.mxu0 0.0
        %v531 = vand.u32 %v248, 4294901760
        %v532 = vsub.f32 %v248, %v531
        %v533 = vand.u32 %v532, 4294901760
        %v534 = vsub.f32 %v532, %v533
        %v535 = vand.u32 %v534, 4294901760
        %536 = vmatpush1.xpose.msra.mxu0 %v535
        %537 = vmatprep.subr.mxu0 0.0
        %v538 = vand.u32 %v247, 4294901760
        %v539 = vsub.f32 %v247, %v538
        %v540 = vand.u32 %v539, 4294901760
        %v541 = vsub.f32 %v539, %v540
        %v542 = vand.u32 %v541, 4294901760
        %543 = vmatpush1.xpose.msra.mxu0 %v542
        %544 = vmatprep.subr.mxu0 0.0
        %v545 = vand.u32 %v246, 4294901760
        %v546 = vsub.f32 %v246, %v545
        %v547 = vand.u32 %v546, 4294901760
        %v548 = vsub.f32 %v546, %v547
        %v549 = vand.u32 %v548, 4294901760
        %550 = vmatpush1.xpose.msra.mxu0 %v549
        %551 = vmatprep.subr.mxu0 0.0
        %v552 = vand.u32 %v245, 4294901760
        %v553 = vsub.f32 %v245, %v552
        %v554 = vand.u32 %v553, 4294901760
        %v555 = vsub.f32 %v553, %v554
        %v556 = vand.u32 %v555, 4294901760
        %557 = vmatpush1.xpose.msra.mxu0 %v556
        %558 = vmatprep.subr.mxu0 0.0
        %v559 = vand.u32 %v244, 4294901760
        %v560 = vsub.f32 %v244, %v559
        %v561 = vand.u32 %v560, 4294901760
        %v562 = vsub.f32 %v560, %v561
        %v563 = vand.u32 %v562, 4294901760
        %564 = vmatpush1.xpose.msra.mxu0 %v563
        %565 = vmatprep.subr.mxu0 0.0
        %v566 = vand.u32 %v243, 4294901760
        %v567 = vsub.f32 %v243, %v566
        %v568 = vand.u32 %v567, 4294901760
        %v569 = vsub.f32 %v567, %v568
        %v570 = vand.u32 %v569, 4294901760
        %571 = vmatpush1.xpose.msra.mxu0 %v570
        %572 = vmatprep.subr.mxu0 0.0
        %v573 = vand.u32 %v242, 4294901760
        %v574 = vsub.f32 %v242, %v573
        %v575 = vand.u32 %v574, 4294901760
        %v576 = vsub.f32 %v574, %v575
        %v577 = vand.u32 %v576, 4294901760
        %578 = vmatpush1.xpose.msra.mxu0 %v577
        %579 = vmatprep.subr.mxu0 0.0
        %v580 = vand.u32 %v241, 4294901760
        %v581 = vsub.f32 %v241, %v580
        %v582 = vand.u32 %v581, 4294901760
        %v583 = vsub.f32 %v581, %v582
        %v584 = vand.u32 %v583, 4294901760
        %585 = vmatpush1.xpose.msra.mxu0 %v584
        %586 = vmatprep.subr.mxu0 0.0
        %v587 = vand.u32 %v240, 4294901760
        %v588 = vsub.f32 %v240, %v587
        %v589 = vand.u32 %v588, 4294901760
        %v590 = vsub.f32 %v588, %v589
        %v591 = vand.u32 %v590, 4294901760
        %592 = vmatpush1.xpose.msra.mxu0 %v591
        %593 = vmatprep.subr.mxu0 0.0
        %v594 = vand.u32 %v239, 4294901760
        %v595 = vsub.f32 %v239, %v594
        %v596 = vand.u32 %v595, 4294901760
        %v597 = vsub.f32 %v595, %v596
        %v598 = vand.u32 %v597, 4294901760
        %599 = vmatpush1.xpose.msra.mxu0 %v598
        %600 = vmatprep.subr.mxu0 0.0
        %v601 = vand.u32 %v238, 4294901760
        %v602 = vsub.f32 %v238, %v601
        %v603 = vand.u32 %v602, 4294901760
        %v604 = vsub.f32 %v602, %v603
        %v605 = vand.u32 %v604, 4294901760
        %606 = vmatpush1.xpose.msra.mxu0 %v605
        %607 = vmatprep.subr.mxu0 0.0
        %608 = vmatpush2.xpose.msra.mxu0 0.0
        %609 = vmatprep.subr.mxu0 0.0
        %610 = vmatpush2.xpose.msra.mxu0 0.0
        %611 = vmatprep.subr.mxu0 0.0
        %612 = vmatpush2.xpose.msra.mxu0 0.0
        %613 = vmatprep.subr.mxu0 0.0
        %614 = vmatpush2.xpose.msra.mxu0 0.0
        %615 = vmatprep.subr.mxu0 0.0
        %616 = vmatpush2.xpose.msra.mxu0 0.0
        %617 = vmatprep.subr.mxu0 0.0
        %618 = vmatpush2.xpose.msra.mxu0 0.0
        %619 = vmatprep.subr.mxu0 0.0
        %620 = vmatpush2.xpose.msra.mxu0 0.0
        %621 = vmatprep.subr.mxu0 0.0
        %622 = vmatpush2.xpose.msra.mxu0 0.0
        %623 = vmatprep.subr.mxu0 0.0
        %624 = vmatpush2.xpose.msra.mxu0 0.0
        %625 = vmatprep.subr.mxu0 0.0
        %626 = vmatpush2.xpose.msra.mxu0 0.0
        %627 = vmatprep.subr.mxu0 0.0
        %628 = vmatpush2.xpose.msra.mxu0 0.0
        %629 = vmatprep.subr.mxu0 0.0
        %630 = vmatpush2.xpose.msra.mxu0 0.0
        %631 = vmatprep.subr.mxu0 0.0
        %632 = vmatpush2.xpose.msra.mxu0 0.0
        %633 = vmatprep.subr.mxu0 0.0
        %634 = vmatpush2.xpose.msra.mxu0 0.0
        %635 = vmatprep.subr.mxu0 0.0
        %636 = vmatpush2.xpose.msra.mxu0 0.0
        %637 = vmatprep.subr.mxu0 0.0
        %638 = vmatpush2.xpose.msra.mxu0 0.0
        %639 = vmatprep.mubr.f32.mxu0 0.0
        %v640 = vand.u32 %v222, 4294901760
        %641 = vmatmul.mubr.f32.gmra.mxu0 %v640
        %v642 = vpop.f32.mrf.mxu0
        %v643 = vadd.f32 %v342, %v642
        %v644 = vpop.f32.mrf.mxu0
        %645 = vmatprep.mubr.f32.mxu0 0.0
        %v646 = vand.u32 %v223, 4294901760
        %647 = vmatmul.mubr.f32.gmra.mxu0 %v646
        %v648 = vpop.f32.mrf.mxu0
        %v649 = vadd.f32 %v352, %v648
        %v650 = vpop.f32.mrf.mxu0
        %651 = vmatprep.mubr.f32.mxu0 0.0
        %v652 = vand.u32 %v224, 4294901760
        %653 = vmatmul.mubr.f32.gmra.mxu0 %v652
        %v654 = vpop.f32.mrf.mxu0
        %v655 = vadd.f32 %v362, %v654
        %v656 = vpop.f32.mrf.mxu0
        %657 = vmatprep.mubr.f32.mxu0 0.0
        %v658 = vand.u32 %v225, 4294901760
        %659 = vmatmul.mubr.f32.gmra.mxu0 %v658
        %v660 = vpop.f32.mrf.mxu0
        %v661 = vadd.f32 %v372, %v660
        %v662 = vpop.f32.mrf.mxu0
        %663 = vmatprep.mubr.f32.mxu0 0.0
        %v664 = vand.u32 %v226, 4294901760
        %665 = vmatmul.mubr.f32.gmra.mxu0 %v664
        %v666 = vpop.f32.mrf.mxu0
        %v667 = vadd.f32 %v382, %v666
        %v668 = vpop.f32.mrf.mxu0
        %669 = vmatprep.mubr.f32.mxu0 0.0
        %v670 = vand.u32 %v227, 4294901760
        %671 = vmatmul.mubr.f32.gmra.mxu0 %v670
        %v672 = vpop.f32.mrf.mxu0
        %v673 = vadd.f32 %v392, %v672
        %v674 = vpop.f32.mrf.mxu0
        %675 = vmatprep.mubr.f32.mxu0 0.0
        %v676 = vand.u32 %v228, 4294901760
        %677 = vmatmul.mubr.f32.gmra.mxu0 %v676
        %v678 = vpop.f32.mrf.mxu0
        %v679 = vadd.f32 %v402, %v678
        %v680 = vpop.f32.mrf.mxu0
        %681 = vmatprep.mubr.f32.mxu0 0.0
        %v682 = vand.u32 %v229, 4294901760
        %683 = vmatmul.mubr.f32.gmra.mxu0 %v682
        %v684 = vpop.f32.mrf.mxu0
        %v685 = vadd.f32 %v412, %v684
        %v686 = vpop.f32.mrf.mxu0
        %687 = vmatprep.mubr.f32.mxu0 0.0
        %v688 = vand.u32 %v230, 4294901760
        %689 = vmatmul.mubr.f32.gmra.mxu0 %v688
        %v690 = vpop.f32.mrf.mxu0
        %v691 = vadd.f32 %v422, %v690
        %v692 = vpop.f32.mrf.mxu0
        %693 = vmatprep.mubr.f32.mxu0 0.0
        %v694 = vand.u32 %v231, 4294901760
        %695 = vmatmul.mubr.f32.gmra.mxu0 %v694
        %v696 = vpop.f32.mrf.mxu0
        %v697 = vadd.f32 %v432, %v696
        %v698 = vpop.f32.mrf.mxu0
        %699 = vmatprep.mubr.f32.mxu0 0.0
        %v700 = vand.u32 %v232, 4294901760
        %701 = vmatmul.mubr.f32.gmra.mxu0 %v700
        %v702 = vpop.f32.mrf.mxu0
        %v703 = vadd.f32 %v442, %v702
        %v704 = vpop.f32.mrf.mxu0
        %705 = vmatprep.mubr.f32.mxu0 0.0
        %v706 = vand.u32 %v233, 4294901760
        %707 = vmatmul.mubr.f32.gmra.mxu0 %v706
        %v708 = vpop.f32.mrf.mxu0
        %v709 = vadd.f32 %v452, %v708
        %v710 = vpop.f32.mrf.mxu0
        %711 = vmatprep.mubr.f32.mxu0 0.0
        %v712 = vand.u32 %v234, 4294901760
        %713 = vmatmul.mubr.f32.gmra.mxu0 %v712
        %v714 = vpop.f32.mrf.mxu0
        %v715 = vadd.f32 %v462, %v714
        %v716 = vpop.f32.mrf.mxu0
        %717 = vmatprep.mubr.f32.mxu0 0.0
        %v718 = vand.u32 %v235, 4294901760
        %719 = vmatmul.mubr.f32.gmra.mxu0 %v718
        %v720 = vpop.f32.mrf.mxu0
        %v721 = vadd.f32 %v472, %v720
        %v722 = vpop.f32.mrf.mxu0
        %723 = vmatprep.mubr.f32.mxu0 0.0
        %v724 = vand.u32 %v236, 4294901760
        %725 = vmatmul.mubr.f32.gmra.mxu0 %v724
        %v726 = vpop.f32.mrf.mxu0
        %v727 = vadd.f32 %v482, %v726
        %v728 = vpop.f32.mrf.mxu0
        %729 = vmatprep.mubr.f32.mxu0 0.0
        %v730 = vand.u32 %v237, 4294901760
        %731 = vmatmul.mubr.f32.gmra.mxu0 %v730
        %v732 = vpop.f32.mrf.mxu0
        %v733 = vadd.f32 %v492, %v732
        %v734 = vpop.f32.mrf.mxu0
        %735 = vdwg.mxu0
        %736 = vmatprep.subr.mxu0 0.0
        %v737 = vand.u32 %v253, 4294901760
        %v738 = vsub.f32 %v253, %v737
        %739 = vmatpush1.xpose.msra.mxu0 %v738
        %740 = vmatprep.subr.mxu0 0.0
        %v741 = vand.u32 %v252, 4294901760
        %v742 = vsub.f32 %v252, %v741
        %743 = vmatpush1.xpose.msra.mxu0 %v742
        %744 = vmatprep.subr.mxu0 0.0
        %v745 = vand.u32 %v251, 4294901760
        %v746 = vsub.f32 %v251, %v745
        %747 = vmatpush1.xpose.msra.mxu0 %v746
        %748 = vmatprep.subr.mxu0 0.0
        %v749 = vand.u32 %v250, 4294901760
        %v750 = vsub.f32 %v250, %v749
        %751 = vmatpush1.xpose.msra.mxu0 %v750
        %752 = vmatprep.subr.mxu0 0.0
        %v753 = vand.u32 %v249, 4294901760
        %v754 = vsub.f32 %v249, %v753
        %755 = vmatpush1.xpose.msra.mxu0 %v754
        %756 = vmatprep.subr.mxu0 0.0
        %v757 = vand.u32 %v248, 4294901760
        %v758 = vsub.f32 %v248, %v757
        %759 = vmatpush1.xpose.msra.mxu0 %v758
        %760 = vmatprep.subr.mxu0 0.0
        %v761 = vand.u32 %v247, 4294901760
        %v762 = vsub.f32 %v247, %v761
        %763 = vmatpush1.xpose.msra.mxu0 %v762
        %764 = vmatprep.subr.mxu0 0.0
        %v765 = vand.u32 %v246, 4294901760
        %v766 = vsub.f32 %v246, %v765
        %767 = vmatpush1.xpose.msra.mxu0 %v766
        %768 = vmatprep.subr.mxu0 0.0
        %v769 = vand.u32 %v245, 4294901760
        %v770 = vsub.f32 %v245, %v769
        %771 = vmatpush1.xpose.msra.mxu0 %v770
        %772 = vmatprep.subr.mxu0 0.0
        %v773 = vand.u32 %v244, 4294901760
        %v774 = vsub.f32 %v244, %v773
        %775 = vmatpush1.xpose.msra.mxu0 %v774
        %776 = vmatprep.subr.mxu0 0.0
        %v777 = vand.u32 %v243, 4294901760
        %v778 = vsub.f32 %v243, %v777
        %779 = vmatpush1.xpose.msra.mxu0 %v778
        %780 = vmatprep.subr.mxu0 0.0
        %v781 = vand.u32 %v242, 4294901760
        %v782 = vsub.f32 %v242, %v781
        %783 = vmatpush1.xpose.msra.mxu0 %v782
        %784 = vmatprep.subr.mxu0 0.0
        %v785 = vand.u32 %v241, 4294901760
        %v786 = vsub.f32 %v241, %v785
        %787 = vmatpush1.xpose.msra.mxu0 %v786
        %788 = vmatprep.subr.mxu0 0.0
        %v789 = vand.u32 %v240, 4294901760
        %v790 = vsub.f32 %v240, %v789
        %791 = vmatpush1.xpose.msra.mxu0 %v790
        %792 = vmatprep.subr.mxu0 0.0
        %v793 = vand.u32 %v239, 4294901760
        %v794 = vsub.f32 %v239, %v793
        %795 = vmatpush1.xpose.msra.mxu0 %v794
        %796 = vmatprep.subr.mxu0 0.0
        %v797 = vand.u32 %v238, 4294901760
        %v798 = vsub.f32 %v238, %v797
        %799 = vmatpush1.xpose.msra.mxu0 %v798
        %800 = vmatprep.subr.mxu0 0.0
        %801 = vmatpush2.xpose.msra.mxu0 0.0
        %802 = vmatprep.subr.mxu0 0.0
        %803 = vmatpush2.xpose.msra.mxu0 0.0
        %804 = vmatprep.subr.mxu0 0.0
        %805 = vmatpush2.xpose.msra.mxu0 0.0
        %806 = vmatprep.subr.mxu0 0.0
        %807 = vmatpush2.xpose.msra.mxu0 0.0
        %808 = vmatprep.subr.mxu0 0.0
        %809 = vmatpush2.xpose.msra.mxu0 0.0
        %810 = vmatprep.subr.mxu0 0.0
        %811 = vmatpush2.xpose.msra.mxu0 0.0
        %812 = vmatprep.subr.mxu0 0.0
        %813 = vmatpush2.xpose.msra.mxu0 0.0
        %814 = vmatprep.subr.mxu0 0.0
        %815 = vmatpush2.xpose.msra.mxu0 0.0
        %816 = vmatprep.subr.mxu0 0.0
        %817 = vmatpush2.xpose.msra.mxu0 0.0
        %818 = vmatprep.subr.mxu0 0.0
        %819 = vmatpush2.xpose.msra.mxu0 0.0
        %820 = vmatprep.subr.mxu0 0.0
        %821 = vmatpush2.xpose.msra.mxu0 0.0
        %822 = vmatprep.subr.mxu0 0.0
        %823 = vmatpush2.xpose.msra.mxu0 0.0
        %824 = vmatprep.subr.mxu0 0.0
        %825 = vmatpush2.xpose.msra.mxu0 0.0
        %826 = vmatprep.subr.mxu0 0.0
        %827 = vmatpush2.xpose.msra.mxu0 0.0
        %828 = vmatprep.subr.mxu0 0.0
        %829 = vmatpush2.xpose.msra.mxu0 0.0
        %830 = vmatprep.subr.mxu0 0.0
        %831 = vmatpush2.xpose.msra.mxu0 0.0
        %832 = vmatprep.mubr.f32.mxu0 0.0
        %v833 = vand.u32 %v222, 4294901760
        %v834 = vsub.f32 %v222, %v833
        %835 = vmatmul.mubr.f32.gmra.mxu0 %v834
        %v836 = vpop.f32.mrf.mxu0
        %v837 = vadd.f32 %v643, %v836
        %v838 = vpop.f32.mrf.mxu0
        %839 = vmatprep.mubr.f32.mxu0 0.0
        %v840 = vand.u32 %v223, 4294901760
        %v841 = vsub.f32 %v223, %v840
        %842 = vmatmul.mubr.f32.gmra.mxu0 %v841
        %v843 = vpop.f32.mrf.mxu0
        %v844 = vadd.f32 %v649, %v843
        %v845 = vpop.f32.mrf.mxu0
        %846 = vmatprep.mubr.f32.mxu0 0.0
        %v847 = vand.u32 %v224, 4294901760
        %v848 = vsub.f32 %v224, %v847
        %849 = vmatmul.mubr.f32.gmra.mxu0 %v848
        %v850 = vpop.f32.mrf.mxu0
        %v851 = vadd.f32 %v655, %v850
        %v852 = vpop.f32.mrf.mxu0
        %853 = vmatprep.mubr.f32.mxu0 0.0
        %v854 = vand.u32 %v225, 4294901760
        %v855 = vsub.f32 %v225, %v854
        %856 = vmatmul.mubr.f32.gmra.mxu0 %v855
        %v857 = vpop.f32.mrf.mxu0
        %v858 = vadd.f32 %v661, %v857
        %v859 = vpop.f32.mrf.mxu0
        %860 = vmatprep.mubr.f32.mxu0 0.0
        %v861 = vand.u32 %v226, 4294901760
        %v862 = vsub.f32 %v226, %v861
        %863 = vmatmul.mubr.f32.gmra.mxu0 %v862
        %v864 = vpop.f32.mrf.mxu0
        %v865 = vadd.f32 %v667, %v864
        %v866 = vpop.f32.mrf.mxu0
        %867 = vmatprep.mubr.f32.mxu0 0.0
        %v868 = vand.u32 %v227, 4294901760
        %v869 = vsub.f32 %v227, %v868
        %870 = vmatmul.mubr.f32.gmra.mxu0 %v869
        %v871 = vpop.f32.mrf.mxu0
        %v872 = vadd.f32 %v673, %v871
        %v873 = vpop.f32.mrf.mxu0
        %874 = vmatprep.mubr.f32.mxu0 0.0
        %v875 = vand.u32 %v228, 4294901760
        %v876 = vsub.f32 %v228, %v875
        %877 = vmatmul.mubr.f32.gmra.mxu0 %v876
        %v878 = vpop.f32.mrf.mxu0
        %v879 = vadd.f32 %v679, %v878
        %v880 = vpop.f32.mrf.mxu0
        %881 = vmatprep.mubr.f32.mxu0 0.0
        %v882 = vand.u32 %v229, 4294901760
        %v883 = vsub.f32 %v229, %v882
        %884 = vmatmul.mubr.f32.gmra.mxu0 %v883
        %v885 = vpop.f32.mrf.mxu0
        %v886 = vadd.f32 %v685, %v885
        %v887 = vpop.f32.mrf.mxu0
        %888 = vmatprep.mubr.f32.mxu0 0.0
        %v889 = vand.u32 %v230, 4294901760
        %v890 = vsub.f32 %v230, %v889
        %891 = vmatmul.mubr.f32.gmra.mxu0 %v890
        %v892 = vpop.f32.mrf.mxu0
        %v893 = vadd.f32 %v691, %v892
        %v894 = vpop.f32.mrf.mxu0
        %895 = vmatprep.mubr.f32.mxu0 0.0
        %v896 = vand.u32 %v231, 4294901760
        %v897 = vsub.f32 %v231, %v896
        %898 = vmatmul.mubr.f32.gmra.mxu0 %v897
        %v899 = vpop.f32.mrf.mxu0
        %v900 = vadd.f32 %v697, %v899
        %v901 = vpop.f32.mrf.mxu0
        %902 = vmatprep.mubr.f32.mxu0 0.0
        %v903 = vand.u32 %v232, 4294901760
        %v904 = vsub.f32 %v232, %v903
        %905 = vmatmul.mubr.f32.gmra.mxu0 %v904
        %v906 = vpop.f32.mrf.mxu0
        %v907 = vadd.f32 %v703, %v906
        %v908 = vpop.f32.mrf.mxu0
        %909 = vmatprep.mubr.f32.mxu0 0.0
        %v910 = vand.u32 %v233, 4294901760
        %v911 = vsub.f32 %v233, %v910
        %912 = vmatmul.mubr.f32.gmra.mxu0 %v911
        %v913 = vpop.f32.mrf.mxu0
        %v914 = vadd.f32 %v709, %v913
        %v915 = vpop.f32.mrf.mxu0
        %916 = vmatprep.mubr.f32.mxu0 0.0
        %v917 = vand.u32 %v234, 4294901760
        %v918 = vsub.f32 %v234, %v917
        %919 = vmatmul.mubr.f32.gmra.mxu0 %v918
        %v920 = vpop.f32.mrf.mxu0
        %v921 = vadd.f32 %v715, %v920
        %v922 = vpop.f32.mrf.mxu0
        %923 = vmatprep.mubr.f32.mxu0 0.0
        %v924 = vand.u32 %v235, 4294901760
        %v925 = vsub.f32 %v235, %v924
        %926 = vmatmul.mubr.f32.gmra.mxu0 %v925
        %v927 = vpop.f32.mrf.mxu0
        %v928 = vadd.f32 %v721, %v927
        %v929 = vpop.f32.mrf.mxu0
        %930 = vmatprep.mubr.f32.mxu0 0.0
        %v931 = vand.u32 %v236, 4294901760
        %v932 = vsub.f32 %v236, %v931
        %933 = vmatmul.mubr.f32.gmra.mxu0 %v932
        %v934 = vpop.f32.mrf.mxu0
        %v935 = vadd.f32 %v727, %v934
        %v936 = vpop.f32.mrf.mxu0
        %937 = vmatprep.mubr.f32.mxu0 0.0
        %v938 = vand.u32 %v237, 4294901760
        %v939 = vsub.f32 %v237, %v938
        %940 = vmatmul.mubr.f32.gmra.mxu0 %v939
        %v941 = vpop.f32.mrf.mxu0
        %v942 = vadd.f32 %v733, %v941
        %v943 = vpop.f32.mrf.mxu0
        %944 = vdwg.mxu0
        %945 = vmatprep.subr.mxu0 0.0
        %v946 = vand.u32 %v253, 4294901760
        %947 = vmatpush1.xpose.msra.mxu0 %v946
        %948 = vmatprep.subr.mxu0 0.0
        %v949 = vand.u32 %v252, 4294901760
        %950 = vmatpush1.xpose.msra.mxu0 %v949
        %951 = vmatprep.subr.mxu0 0.0
        %v952 = vand.u32 %v251, 4294901760
        %953 = vmatpush1.xpose.msra.mxu0 %v952
        %954 = vmatprep.subr.mxu0 0.0
        %v955 = vand.u32 %v250, 4294901760
        %956 = vmatpush1.xpose.msra.mxu0 %v955
        %957 = vmatprep.subr.mxu0 0.0
        %v958 = vand.u32 %v249, 4294901760
        %959 = vmatpush1.xpose.msra.mxu0 %v958
        %960 = vmatprep.subr.mxu0 0.0
        %v961 = vand.u32 %v248, 4294901760
        %962 = vmatpush1.xpose.msra.mxu0 %v961
        %963 = vmatprep.subr.mxu0 0.0
        %v964 = vand.u32 %v247, 4294901760
        %965 = vmatpush1.xpose.msra.mxu0 %v964
        %966 = vmatprep.subr.mxu0 0.0
        %v967 = vand.u32 %v246, 4294901760
        %968 = vmatpush1.xpose.msra.mxu0 %v967
        %969 = vmatprep.subr.mxu0 0.0
        %v970 = vand.u32 %v245, 4294901760
        %971 = vmatpush1.xpose.msra.mxu0 %v970
        %972 = vmatprep.subr.mxu0 0.0
        %v973 = vand.u32 %v244, 4294901760
        %974 = vmatpush1.xpose.msra.mxu0 %v973
        %975 = vmatprep.subr.mxu0 0.0
        %v976 = vand.u32 %v243, 4294901760
        %977 = vmatpush1.xpose.msra.mxu0 %v976
        %978 = vmatprep.subr.mxu0 0.0
        %v979 = vand.u32 %v242, 4294901760
        %980 = vmatpush1.xpose.msra.mxu0 %v979
        %981 = vmatprep.subr.mxu0 0.0
        %v982 = vand.u32 %v241, 4294901760
        %983 = vmatpush1.xpose.msra.mxu0 %v982
        %984 = vmatprep.subr.mxu0 0.0
        %v985 = vand.u32 %v240, 4294901760
        %986 = vmatpush1.xpose.msra.mxu0 %v985
        %987 = vmatprep.subr.mxu0 0.0
        %v988 = vand.u32 %v239, 4294901760
        %989 = vmatpush1.xpose.msra.mxu0 %v988
        %990 = vmatprep.subr.mxu0 0.0
        %v991 = vand.u32 %v238, 4294901760
        %992 = vmatpush1.xpose.msra.mxu0 %v991
        %993 = vmatprep.subr.mxu0 0.0
        %994 = vmatpush2.xpose.msra.mxu0 0.0
        %995 = vmatprep.subr.mxu0 0.0
        %996 = vmatpush2.xpose.msra.mxu0 0.0
        %997 = vmatprep.subr.mxu0 0.0
        %998 = vmatpush2.xpose.msra.mxu0 0.0
        %999 = vmatprep.subr.mxu0 0.0
        %1000 = vmatpush2.xpose.msra.mxu0 0.0
        %1001 = vmatprep.subr.mxu0 0.0
        %1002 = vmatpush2.xpose.msra.mxu0 0.0
        %1003 = vmatprep.subr.mxu0 0.0
        %1004 = vmatpush2.xpose.msra.mxu0 0.0
        %1005 = vmatprep.subr.mxu0 0.0
        %1006 = vmatpush2.xpose.msra.mxu0 0.0
        %1007 = vmatprep.subr.mxu0 0.0
        %1008 = vmatpush2.xpose.msra.mxu0 0.0
        %1009 = vmatprep.subr.mxu0 0.0
        %1010 = vmatpush2.xpose.msra.mxu0 0.0
        %1011 = vmatprep.subr.mxu0 0.0
        %1012 = vmatpush2.xpose.msra.mxu0 0.0
        %1013 = vmatprep.subr.mxu0 0.0
        %1014 = vmatpush2.xpose.msra.mxu0 0.0
        %1015 = vmatprep.subr.mxu0 0.0
        %1016 = vmatpush2.xpose.msra.mxu0 0.0
        %1017 = vmatprep.subr.mxu0 0.0
        %1018 = vmatpush2.xpose.msra.mxu0 0.0
        %1019 = vmatprep.subr.mxu0 0.0
        %1020 = vmatpush2.xpose.msra.mxu0 0.0
        %1021 = vmatprep.subr.mxu0 0.0
        %1022 = vmatpush2.xpose.msra.mxu0 0.0
        %1023 = vmatprep.subr.mxu0 0.0
        %1024 = vmatpush2.xpose.msra.mxu0 0.0
        %1025 = vmatprep.mubr.f32.mxu0 0.0
        %v1026 = vand.u32 %v222, 4294901760
        %v1027 = vsub.f32 %v222, %v1026
        %v1028 = vand.u32 %v1027, 4294901760
        %1029 = vmatmul.mubr.f32.gmra.mxu0 %v1028
        %v1030 = vpop.f32.mrf.mxu0
        %v1031 = vadd.f32 %v837, %v1030
        %v1032 = vpop.f32.mrf.mxu0
        %1033 = vmatprep.mubr.f32.mxu0 0.0
        %v1034 = vand.u32 %v223, 4294901760
        %v1035 = vsub.f32 %v223, %v1034
        %v1036 = vand.u32 %v1035, 4294901760
        %1037 = vmatmul.mubr.f32.gmra.mxu0 %v1036
        %v1038 = vpop.f32.mrf.mxu0
        %v1039 = vadd.f32 %v844, %v1038
        %v1040 = vpop.f32.mrf.mxu0
        %1041 = vmatprep.mubr.f32.mxu0 0.0
        %v1042 = vand.u32 %v224, 4294901760
        %v1043 = vsub.f32 %v224, %v1042
        %v1044 = vand.u32 %v1043, 4294901760
        %1045 = vmatmul.mubr.f32.gmra.mxu0 %v1044
        %v1046 = vpop.f32.mrf.mxu0
        %v1047 = vadd.f32 %v851, %v1046
        %v1048 = vpop.f32.mrf.mxu0
        %1049 = vmatprep.mubr.f32.mxu0 0.0
        %v1050 = vand.u32 %v225, 4294901760
        %v1051 = vsub.f32 %v225, %v1050
        %v1052 = vand.u32 %v1051, 4294901760
        %1053 = vmatmul.mubr.f32.gmra.mxu0 %v1052
        %v1054 = vpop.f32.mrf.mxu0
        %v1055 = vadd.f32 %v858, %v1054
        %v1056 = vpop.f32.mrf.mxu0
        %1057 = vmatprep.mubr.f32.mxu0 0.0
        %v1058 = vand.u32 %v226, 4294901760
        %v1059 = vsub.f32 %v226, %v1058
        %v1060 = vand.u32 %v1059, 4294901760
        %1061 = vmatmul.mubr.f32.gmra.mxu0 %v1060
        %v1062 = vpop.f32.mrf.mxu0
        %v1063 = vadd.f32 %v865, %v1062
        %v1064 = vpop.f32.mrf.mxu0
        %1065 = vmatprep.mubr.f32.mxu0 0.0
        %v1066 = vand.u32 %v227, 4294901760
        %v1067 = vsub.f32 %v227, %v1066
        %v1068 = vand.u32 %v1067, 4294901760
        %1069 = vmatmul.mubr.f32.gmra.mxu0 %v1068
        %v1070 = vpop.f32.mrf.mxu0
        %v1071 = vadd.f32 %v872, %v1070
        %v1072 = vpop.f32.mrf.mxu0
        %1073 = vmatprep.mubr.f32.mxu0 0.0
        %v1074 = vand.u32 %v228, 4294901760
        %v1075 = vsub.f32 %v228, %v1074
        %v1076 = vand.u32 %v1075, 4294901760
        %1077 = vmatmul.mubr.f32.gmra.mxu0 %v1076
        %v1078 = vpop.f32.mrf.mxu0
        %v1079 = vadd.f32 %v879, %v1078
        %v1080 = vpop.f32.mrf.mxu0
        %1081 = vmatprep.mubr.f32.mxu0 0.0
        %v1082 = vand.u32 %v229, 4294901760
        %v1083 = vsub.f32 %v229, %v1082
        %v1084 = vand.u32 %v1083, 4294901760
        %1085 = vmatmul.mubr.f32.gmra.mxu0 %v1084
        %v1086 = vpop.f32.mrf.mxu0
        %v1087 = vadd.f32 %v886, %v1086
        %v1088 = vpop.f32.mrf.mxu0
        %1089 = vmatprep.mubr.f32.mxu0 0.0
        %v1090 = vand.u32 %v230, 4294901760
        %v1091 = vsub.f32 %v230, %v1090
        %v1092 = vand.u32 %v1091, 4294901760
        %1093 = vmatmul.mubr.f32.gmra.mxu0 %v1092
        %v1094 = vpop.f32.mrf.mxu0
        %v1095 = vadd.f32 %v893, %v1094
        %v1096 = vpop.f32.mrf.mxu0
        %1097 = vmatprep.mubr.f32.mxu0 0.0
        %v1098 = vand.u32 %v231, 4294901760
        %v1099 = vsub.f32 %v231, %v1098
        %v1100 = vand.u32 %v1099, 4294901760
        %1101 = vmatmul.mubr.f32.gmra.mxu0 %v1100
        %v1102 = vpop.f32.mrf.mxu0
        %v1103 = vadd.f32 %v900, %v1102
        %v1104 = vpop.f32.mrf.mxu0
        %1105 = vmatprep.mubr.f32.mxu0 0.0
        %v1106 = vand.u32 %v232, 4294901760
        %v1107 = vsub.f32 %v232, %v1106
        %v1108 = vand.u32 %v1107, 4294901760
        %1109 = vmatmul.mubr.f32.gmra.mxu0 %v1108
        %v1110 = vpop.f32.mrf.mxu0
        %v1111 = vadd.f32 %v907, %v1110
        %v1112 = vpop.f32.mrf.mxu0
        %1113 = vmatprep.mubr.f32.mxu0 0.0
        %v1114 = vand.u32 %v233, 4294901760
        %v1115 = vsub.f32 %v233, %v1114
        %v1116 = vand.u32 %v1115, 4294901760
        %1117 = vmatmul.mubr.f32.gmra.mxu0 %v1116
        %v1118 = vpop.f32.mrf.mxu0
        %v1119 = vadd.f32 %v914, %v1118
        %v1120 = vpop.f32.mrf.mxu0
        %1121 = vmatprep.mubr.f32.mxu0 0.0
        %v1122 = vand.u32 %v234, 4294901760
        %v1123 = vsub.f32 %v234, %v1122
        %v1124 = vand.u32 %v1123, 4294901760
        %1125 = vmatmul.mubr.f32.gmra.mxu0 %v1124
        %v1126 = vpop.f32.mrf.mxu0
        %v1127 = vadd.f32 %v921, %v1126
        %v1128 = vpop.f32.mrf.mxu0
        %1129 = vmatprep.mubr.f32.mxu0 0.0
        %v1130 = vand.u32 %v235, 4294901760
        %v1131 = vsub.f32 %v235, %v1130
        %v1132 = vand.u32 %v1131, 4294901760
        %1133 = vmatmul.mubr.f32.gmra.mxu0 %v1132
        %v1134 = vpop.f32.mrf.mxu0
        %v1135 = vadd.f32 %v928, %v1134
        %v1136 = vpop.f32.mrf.mxu0
        %1137 = vmatprep.mubr.f32.mxu0 0.0
        %v1138 = vand.u32 %v236, 4294901760
        %v1139 = vsub.f32 %v236, %v1138
        %v1140 = vand.u32 %v1139, 4294901760
        %1141 = vmatmul.mubr.f32.gmra.mxu0 %v1140
        %v1142 = vpop.f32.mrf.mxu0
        %v1143 = vadd.f32 %v935, %v1142
        %v1144 = vpop.f32.mrf.mxu0
        %1145 = vmatprep.mubr.f32.mxu0 0.0
        %v1146 = vand.u32 %v237, 4294901760
        %v1147 = vsub.f32 %v237, %v1146
        %v1148 = vand.u32 %v1147, 4294901760
        %1149 = vmatmul.mubr.f32.gmra.mxu0 %v1148
        %v1150 = vpop.f32.mrf.mxu0
        %v1151 = vadd.f32 %v942, %v1150
        %v1152 = vpop.f32.mrf.mxu0
        %1153 = vdwg.mxu0
        %1154 = vmatprep.subr.mxu0 0.0
        %v1155 = vand.u32 %v253, 4294901760
        %v1156 = vsub.f32 %v253, %v1155
        %v1157 = vand.u32 %v1156, 4294901760
        %1158 = vmatpush1.xpose.msra.mxu0 %v1157
        %1159 = vmatprep.subr.mxu0 0.0
        %v1160 = vand.u32 %v252, 4294901760
        %v1161 = vsub.f32 %v252, %v1160
        %v1162 = vand.u32 %v1161, 4294901760
        %1163 = vmatpush1.xpose.msra.mxu0 %v1162
        %1164 = vmatprep.subr.mxu0 0.0
        %v1165 = vand.u32 %v251, 4294901760
        %v1166 = vsub.f32 %v251, %v1165
        %v1167 = vand.u32 %v1166, 4294901760
        %1168 = vmatpush1.xpose.msra.mxu0 %v1167
        %1169 = vmatprep.subr.mxu0 0.0
        %v1170 = vand.u32 %v250, 4294901760
        %v1171 = vsub.f32 %v250, %v1170
        %v1172 = vand.u32 %v1171, 4294901760
        %1173 = vmatpush1.xpose.msra.mxu0 %v1172
        %1174 = vmatprep.subr.mxu0 0.0
        %v1175 = vand.u32 %v249, 4294901760
        %v1176 = vsub.f32 %v249, %v1175
        %v1177 = vand.u32 %v1176, 4294901760
        %1178 = vmatpush1.xpose.msra.mxu0 %v1177
        %1179 = vmatprep.subr.mxu0 0.0
        %v1180 = vand.u32 %v248, 4294901760
        %v1181 = vsub.f32 %v248, %v1180
        %v1182 = vand.u32 %v1181, 4294901760
        %1183 = vmatpush1.xpose.msra.mxu0 %v1182
        %1184 = vmatprep.subr.mxu0 0.0
        %v1185 = vand.u32 %v247, 4294901760
        %v1186 = vsub.f32 %v247, %v1185
        %v1187 = vand.u32 %v1186, 4294901760
        %1188 = vmatpush1.xpose.msra.mxu0 %v1187
        %1189 = vmatprep.subr.mxu0 0.0
        %v1190 = vand.u32 %v246, 4294901760
        %v1191 = vsub.f32 %v246, %v1190
        %v1192 = vand.u32 %v1191, 4294901760
        %1193 = vmatpush1.xpose.msra.mxu0 %v1192
        %1194 = vmatprep.subr.mxu0 0.0
        %v1195 = vand.u32 %v245, 4294901760
        %v1196 = vsub.f32 %v245, %v1195
        %v1197 = vand.u32 %v1196, 4294901760
        %1198 = vmatpush1.xpose.msra.mxu0 %v1197
        %1199 = vmatprep.subr.mxu0 0.0
        %v1200 = vand.u32 %v244, 4294901760
        %v1201 = vsub.f32 %v244, %v1200
        %v1202 = vand.u32 %v1201, 4294901760
        %1203 = vmatpush1.xpose.msra.mxu0 %v1202
        %1204 = vmatprep.subr.mxu0 0.0
        %v1205 = vand.u32 %v243, 4294901760
        %v1206 = vsub.f32 %v243, %v1205
        %v1207 = vand.u32 %v1206, 4294901760
        %1208 = vmatpush1.xpose.msra.mxu0 %v1207
        %1209 = vmatprep.subr.mxu0 0.0
        %v1210 = vand.u32 %v242, 4294901760
        %v1211 = vsub.f32 %v242, %v1210
        %v1212 = vand.u32 %v1211, 4294901760
        %1213 = vmatpush1.xpose.msra.mxu0 %v1212
        %1214 = vmatprep.subr.mxu0 0.0
        %v1215 = vand.u32 %v241, 4294901760
        %v1216 = vsub.f32 %v241, %v1215
        %v1217 = vand.u32 %v1216, 4294901760
        %1218 = vmatpush1.xpose.msra.mxu0 %v1217
        %1219 = vmatprep.subr.mxu0 0.0
        %v1220 = vand.u32 %v240, 4294901760
        %v1221 = vsub.f32 %v240, %v1220
        %v1222 = vand.u32 %v1221, 4294901760
        %1223 = vmatpush1.xpose.msra.mxu0 %v1222
        %1224 = vmatprep.subr.mxu0 0.0
        %v1225 = vand.u32 %v239, 4294901760
        %v1226 = vsub.f32 %v239, %v1225
        %v1227 = vand.u32 %v1226, 4294901760
        %1228 = vmatpush1.xpose.msra.mxu0 %v1227
        %1229 = vmatprep.subr.mxu0 0.0
        %v1230 = vand.u32 %v238, 4294901760
        %v1231 = vsub.f32 %v238, %v1230
        %v1232 = vand.u32 %v1231, 4294901760
        %1233 = vmatpush1.xpose.msra.mxu0 %v1232
        %1234 = vmatprep.subr.mxu0 0.0
        %1235 = vmatpush2.xpose.msra.mxu0 0.0
        %1236 = vmatprep.subr.mxu0 0.0
        %1237 = vmatpush2.xpose.msra.mxu0 0.0
        %1238 = vmatprep.subr.mxu0 0.0
        %1239 = vmatpush2.xpose.msra.mxu0 0.0
        %1240 = vmatprep.subr.mxu0 0.0
        %1241 = vmatpush2.xpose.msra.mxu0 0.0
        %1242 = vmatprep.subr.mxu0 0.0
        %1243 = vmatpush2.xpose.msra.mxu0 0.0
        %1244 = vmatprep.subr.mxu0 0.0
        %1245 = vmatpush2.xpose.msra.mxu0 0.0
        %1246 = vmatprep.subr.mxu0 0.0
        %1247 = vmatpush2.xpose.msra.mxu0 0.0
        %1248 = vmatprep.subr.mxu0 0.0
        %1249 = vmatpush2.xpose.msra.mxu0 0.0
        %1250 = vmatprep.subr.mxu0 0.0
        %1251 = vmatpush2.xpose.msra.mxu0 0.0
        %1252 = vmatprep.subr.mxu0 0.0
        %1253 = vmatpush2.xpose.msra.mxu0 0.0
        %1254 = vmatprep.subr.mxu0 0.0
        %1255 = vmatpush2.xpose.msra.mxu0 0.0
        %1256 = vmatprep.subr.mxu0 0.0
        %1257 = vmatpush2.xpose.msra.mxu0 0.0
        %1258 = vmatprep.subr.mxu0 0.0
        %1259 = vmatpush2.xpose.msra.mxu0 0.0
        %1260 = vmatprep.subr.mxu0 0.0
        %1261 = vmatpush2.xpose.msra.mxu0 0.0
        %1262 = vmatprep.subr.mxu0 0.0
        %1263 = vmatpush2.xpose.msra.mxu0 0.0
        %1264 = vmatprep.subr.mxu0 0.0
        %1265 = vmatpush2.xpose.msra.mxu0 0.0
        %1266 = vmatprep.mubr.f32.mxu0 0.0
        %v1267 = vand.u32 %v222, 4294901760
        %1268 = vmatmul.mubr.f32.gmra.mxu0 %v1267
        %v1269 = vpop.f32.mrf.mxu0
        %v1270 = vadd.f32 %v1031, %v1269
        %v1271 = vpop.f32.mrf.mxu0
        %1272 = vmatprep.mubr.f32.mxu0 0.0
        %v1273 = vand.u32 %v223, 4294901760
        %1274 = vmatmul.mubr.f32.gmra.mxu0 %v1273
        %v1275 = vpop.f32.mrf.mxu0
        %v1276 = vadd.f32 %v1039, %v1275
        %v1277 = vpop.f32.mrf.mxu0
        %1278 = vmatprep.mubr.f32.mxu0 0.0
        %v1279 = vand.u32 %v224, 4294901760
        %1280 = vmatmul.mubr.f32.gmra.mxu0 %v1279
        %v1281 = vpop.f32.mrf.mxu0
        %v1282 = vadd.f32 %v1047, %v1281
        %v1283 = vpop.f32.mrf.mxu0
        %1284 = vmatprep.mubr.f32.mxu0 0.0
        %v1285 = vand.u32 %v225, 4294901760
        %1286 = vmatmul.mubr.f32.gmra.mxu0 %v1285
        %v1287 = vpop.f32.mrf.mxu0
        %v1288 = vadd.f32 %v1055, %v1287
        %v1289 = vpop.f32.mrf.mxu0
        %1290 = vmatprep.mubr.f32.mxu0 0.0
        %v1291 = vand.u32 %v226, 4294901760
        %1292 = vmatmul.mubr.f32.gmra.mxu0 %v1291
        %v1293 = vpop.f32.mrf.mxu0
        %v1294 = vadd.f32 %v1063, %v1293
        %v1295 = vpop.f32.mrf.mxu0
        %1296 = vmatprep.mubr.f32.mxu0 0.0
        %v1297 = vand.u32 %v227, 4294901760
        %1298 = vmatmul.mubr.f32.gmra.mxu0 %v1297
        %v1299 = vpop.f32.mrf.mxu0
        %v1300 = vadd.f32 %v1071, %v1299
        %v1301 = vpop.f32.mrf.mxu0
        %1302 = vmatprep.mubr.f32.mxu0 0.0
        %v1303 = vand.u32 %v228, 4294901760
        %1304 = vmatmul.mubr.f32.gmra.mxu0 %v1303
        %v1305 = vpop.f32.mrf.mxu0
        %v1306 = vadd.f32 %v1079, %v1305
        %v1307 = vpop.f32.mrf.mxu0
        %1308 = vmatprep.mubr.f32.mxu0 0.0
        %v1309 = vand.u32 %v229, 4294901760
        %1310 = vmatmul.mubr.f32.gmra.mxu0 %v1309
        %v1311 = vpop.f32.mrf.mxu0
        %v1312 = vadd.f32 %v1087, %v1311
        %v1313 = vpop.f32.mrf.mxu0
        %1314 = vmatprep.mubr.f32.mxu0 0.0
        %v1315 = vand.u32 %v230, 4294901760
        %1316 = vmatmul.mubr.f32.gmra.mxu0 %v1315
        %v1317 = vpop.f32.mrf.mxu0
        %v1318 = vadd.f32 %v1095, %v1317
        %v1319 = vpop.f32.mrf.mxu0
        %1320 = vmatprep.mubr.f32.mxu0 0.0
        %v1321 = vand.u32 %v231, 4294901760
        %1322 = vmatmul.mubr.f32.gmra.mxu0 %v1321
        %v1323 = vpop.f32.mrf.mxu0
        %v1324 = vadd.f32 %v1103, %v1323
        %v1325 = vpop.f32.mrf.mxu0
        %1326 = vmatprep.mubr.f32.mxu0 0.0
        %v1327 = vand.u32 %v232, 4294901760
        %1328 = vmatmul.mubr.f32.gmra.mxu0 %v1327
        %v1329 = vpop.f32.mrf.mxu0
        %v1330 = vadd.f32 %v1111, %v1329
        %v1331 = vpop.f32.mrf.mxu0
        %1332 = vmatprep.mubr.f32.mxu0 0.0
        %v1333 = vand.u32 %v233, 4294901760
        %1334 = vmatmul.mubr.f32.gmra.mxu0 %v1333
        %v1335 = vpop.f32.mrf.mxu0
        %v1336 = vadd.f32 %v1119, %v1335
        %v1337 = vpop.f32.mrf.mxu0
        %1338 = vmatprep.mubr.f32.mxu0 0.0
        %v1339 = vand.u32 %v234, 4294901760
        %1340 = vmatmul.mubr.f32.gmra.mxu0 %v1339
        %v1341 = vpop.f32.mrf.mxu0
        %v1342 = vadd.f32 %v1127, %v1341
        %v1343 = vpop.f32.mrf.mxu0
        %1344 = vmatprep.mubr.f32.mxu0 0.0
        %v1345 = vand.u32 %v235, 4294901760
        %1346 = vmatmul.mubr.f32.gmra.mxu0 %v1345
        %v1347 = vpop.f32.mrf.mxu0
        %v1348 = vadd.f32 %v1135, %v1347
        %v1349 = vpop.f32.mrf.mxu0
        %1350 = vmatprep.mubr.f32.mxu0 0.0
        %v1351 = vand.u32 %v236, 4294901760
        %1352 = vmatmul.mubr.f32.gmra.mxu0 %v1351
        %v1353 = vpop.f32.mrf.mxu0
        %v1354 = vadd.f32 %v1143, %v1353
        %v1355 = vpop.f32.mrf.mxu0
        %1356 = vmatprep.mubr.f32.mxu0 0.0
        %v1357 = vand.u32 %v237, 4294901760
        %1358 = vmatmul.mubr.f32.gmra.mxu0 %v1357
        %v1359 = vpop.f32.mrf.mxu0
        %v1360 = vadd.f32 %v1151, %v1359
        %v1361 = vpop.f32.mrf.mxu0
        %1362 = vdwg.mxu0
        %1363 = vmatprep.subr.mxu0 0.0
        %v1364 = vand.u32 %v253, 4294901760
        %1365 = vmatpush1.xpose.msra.mxu0 %v1364
        %1366 = vmatprep.subr.mxu0 0.0
        %v1367 = vand.u32 %v252, 4294901760
        %1368 = vmatpush1.xpose.msra.mxu0 %v1367
        %1369 = vmatprep.subr.mxu0 0.0
        %v1370 = vand.u32 %v251, 4294901760
        %1371 = vmatpush1.xpose.msra.mxu0 %v1370
        %1372 = vmatprep.subr.mxu0 0.0
        %v1373 = vand.u32 %v250, 4294901760
        %1374 = vmatpush1.xpose.msra.mxu0 %v1373
        %1375 = vmatprep.subr.mxu0 0.0
        %v1376 = vand.u32 %v249, 4294901760
        %1377 = vmatpush1.xpose.msra.mxu0 %v1376
        %1378 = vmatprep.subr.mxu0 0.0
        %v1379 = vand.u32 %v248, 4294901760
        %1380 = vmatpush1.xpose.msra.mxu0 %v1379
        %1381 = vmatprep.subr.mxu0 0.0
        %v1382 = vand.u32 %v247, 4294901760
        %1383 = vmatpush1.xpose.msra.mxu0 %v1382
        %1384 = vmatprep.subr.mxu0 0.0
        %v1385 = vand.u32 %v246, 4294901760
        %1386 = vmatpush1.xpose.msra.mxu0 %v1385
        %1387 = vmatprep.subr.mxu0 0.0
        %v1388 = vand.u32 %v245, 4294901760
        %1389 = vmatpush1.xpose.msra.mxu0 %v1388
        %1390 = vmatprep.subr.mxu0 0.0
        %v1391 = vand.u32 %v244, 4294901760
        %1392 = vmatpush1.xpose.msra.mxu0 %v1391
        %1393 = vmatprep.subr.mxu0 0.0
        %v1394 = vand.u32 %v243, 4294901760
        %1395 = vmatpush1.xpose.msra.mxu0 %v1394
        %1396 = vmatprep.subr.mxu0 0.0
        %v1397 = vand.u32 %v242, 4294901760
        %1398 = vmatpush1.xpose.msra.mxu0 %v1397
        %1399 = vmatprep.subr.mxu0 0.0
        %v1400 = vand.u32 %v241, 4294901760
        %1401 = vmatpush1.xpose.msra.mxu0 %v1400
        %1402 = vmatprep.subr.mxu0 0.0
        %v1403 = vand.u32 %v240, 4294901760
        %1404 = vmatpush1.xpose.msra.mxu0 %v1403
        %1405 = vmatprep.subr.mxu0 0.0
        %v1406 = vand.u32 %v239, 4294901760
        %1407 = vmatpush1.xpose.msra.mxu0 %v1406
        %1408 = vmatprep.subr.mxu0 0.0
        %v1409 = vand.u32 %v238, 4294901760
        %1410 = vmatpush1.xpose.msra.mxu0 %v1409
        %1411 = vmatprep.subr.mxu0 0.0
        %1412 = vmatpush2.xpose.msra.mxu0 0.0
        %1413 = vmatprep.subr.mxu0 0.0
        %1414 = vmatpush2.xpose.msra.mxu0 0.0
        %1415 = vmatprep.subr.mxu0 0.0
        %1416 = vmatpush2.xpose.msra.mxu0 0.0
        %1417 = vmatprep.subr.mxu0 0.0
        %1418 = vmatpush2.xpose.msra.mxu0 0.0
        %1419 = vmatprep.subr.mxu0 0.0
        %1420 = vmatpush2.xpose.msra.mxu0 0.0
        %1421 = vmatprep.subr.mxu0 0.0
        %1422 = vmatpush2.xpose.msra.mxu0 0.0
        %1423 = vmatprep.subr.mxu0 0.0
        %1424 = vmatpush2.xpose.msra.mxu0 0.0
        %1425 = vmatprep.subr.mxu0 0.0
        %1426 = vmatpush2.xpose.msra.mxu0 0.0
        %1427 = vmatprep.subr.mxu0 0.0
        %1428 = vmatpush2.xpose.msra.mxu0 0.0
        %1429 = vmatprep.subr.mxu0 0.0
        %1430 = vmatpush2.xpose.msra.mxu0 0.0
        %1431 = vmatprep.subr.mxu0 0.0
        %1432 = vmatpush2.xpose.msra.mxu0 0.0
        %1433 = vmatprep.subr.mxu0 0.0
        %1434 = vmatpush2.xpose.msra.mxu0 0.0
        %1435 = vmatprep.subr.mxu0 0.0
        %1436 = vmatpush2.xpose.msra.mxu0 0.0
        %1437 = vmatprep.subr.mxu0 0.0
        %1438 = vmatpush2.xpose.msra.mxu0 0.0
        %1439 = vmatprep.subr.mxu0 0.0
        %1440 = vmatpush2.xpose.msra.mxu0 0.0
        %1441 = vmatprep.subr.mxu0 0.0
        %1442 = vmatpush2.xpose.msra.mxu0 0.0
        %1443 = vmatprep.mubr.f32.mxu0 0.0
        %v1444 = vand.u32 %v222, 4294901760
        %1445 = vmatmul.mubr.f32.gmra.mxu0 %v1444
        %v1446 = vpop.f32.mrf.mxu0
        %v1447 = vadd.f32 %v1270, %v1446
        %v1448 = vpop.f32.mrf.mxu0
        %1449 = vmatprep.mubr.f32.mxu0 0.0
        %v1450 = vand.u32 %v223, 4294901760
        %1451 = vmatmul.mubr.f32.gmra.mxu0 %v1450
        %v1452 = vpop.f32.mrf.mxu0
        %v1453 = vadd.f32 %v1276, %v1452
        %v1454 = vpop.f32.mrf.mxu0
        %1455 = vmatprep.mubr.f32.mxu0 0.0
        %v1456 = vand.u32 %v224, 4294901760
        %1457 = vmatmul.mubr.f32.gmra.mxu0 %v1456
        %v1458 = vpop.f32.mrf.mxu0
        %v1459 = vadd.f32 %v1282, %v1458
        %v1460 = vpop.f32.mrf.mxu0
        %1461 = vmatprep.mubr.f32.mxu0 0.0
        %v1462 = vand.u32 %v225, 4294901760
        %1463 = vmatmul.mubr.f32.gmra.mxu0 %v1462
        %v1464 = vpop.f32.mrf.mxu0
        %v1465 = vadd.f32 %v1288, %v1464
        %v1466 = vpop.f32.mrf.mxu0
        %1467 = vmatprep.mubr.f32.mxu0 0.0
        %v1468 = vand.u32 %v226, 4294901760
        %1469 = vmatmul.mubr.f32.gmra.mxu0 %v1468
        %v1470 = vpop.f32.mrf.mxu0
        %v1471 = vadd.f32 %v1294, %v1470
        %v1472 = vpop.f32.mrf.mxu0
        %1473 = vmatprep.mubr.f32.mxu0 0.0
        %v1474 = vand.u32 %v227, 4294901760
        %1475 = vmatmul.mubr.f32.gmra.mxu0 %v1474
        %v1476 = vpop.f32.mrf.mxu0
        %v1477 = vadd.f32 %v1300, %v1476
        %v1478 = vpop.f32.mrf.mxu0
        %1479 = vmatprep.mubr.f32.mxu0 0.0
        %v1480 = vand.u32 %v228, 4294901760
        %1481 = vmatmul.mubr.f32.gmra.mxu0 %v1480
        %v1482 = vpop.f32.mrf.mxu0
        %v1483 = vadd.f32 %v1306, %v1482
        %v1484 = vpop.f32.mrf.mxu0
        %1485 = vmatprep.mubr.f32.mxu0 0.0
        %v1486 = vand.u32 %v229, 4294901760
        %1487 = vmatmul.mubr.f32.gmra.mxu0 %v1486
        %v1488 = vpop.f32.mrf.mxu0
        %v1489 = vadd.f32 %v1312, %v1488
        %v1490 = vpop.f32.mrf.mxu0
        %1491 = vmatprep.mubr.f32.mxu0 0.0
        %v1492 = vand.u32 %v230, 4294901760
        %1493 = vmatmul.mubr.f32.gmra.mxu0 %v1492
        %v1494 = vpop.f32.mrf.mxu0
        %v1495 = vadd.f32 %v1318, %v1494
        %v1496 = vpop.f32.mrf.mxu0
        %1497 = vmatprep.mubr.f32.mxu0 0.0
        %v1498 = vand.u32 %v231, 4294901760
        %1499 = vmatmul.mubr.f32.gmra.mxu0 %v1498
        %v1500 = vpop.f32.mrf.mxu0
        %v1501 = vadd.f32 %v1324, %v1500
        %v1502 = vpop.f32.mrf.mxu0
        %1503 = vmatprep.mubr.f32.mxu0 0.0
        %v1504 = vand.u32 %v232, 4294901760
        %1505 = vmatmul.mubr.f32.gmra.mxu0 %v1504
        %v1506 = vpop.f32.mrf.mxu0
        %v1507 = vadd.f32 %v1330, %v1506
        %v1508 = vpop.f32.mrf.mxu0
        %1509 = vmatprep.mubr.f32.mxu0 0.0
        %v1510 = vand.u32 %v233, 4294901760
        %1511 = vmatmul.mubr.f32.gmra.mxu0 %v1510
        %v1512 = vpop.f32.mrf.mxu0
        %v1513 = vadd.f32 %v1336, %v1512
        %v1514 = vpop.f32.mrf.mxu0
        %1515 = vmatprep.mubr.f32.mxu0 0.0
        %v1516 = vand.u32 %v234, 4294901760
        %1517 = vmatmul.mubr.f32.gmra.mxu0 %v1516
        %v1518 = vpop.f32.mrf.mxu0
        %v1519 = vadd.f32 %v1342, %v1518
        %v1520 = vpop.f32.mrf.mxu0
        %1521 = vmatprep.mubr.f32.mxu0 0.0
        %v1522 = vand.u32 %v235, 4294901760
        %1523 = vmatmul.mubr.f32.gmra.mxu0 %v1522
        %v1524 = vpop.f32.mrf.mxu0
        %v1525 = vadd.f32 %v1348, %v1524
        %v1526 = vpop.f32.mrf.mxu0
        %1527 = vmatprep.mubr.f32.mxu0 0.0
        %v1528 = vand.u32 %v236, 4294901760
        %1529 = vmatmul.mubr.f32.gmra.mxu0 %v1528
        %v1530 = vpop.f32.mrf.mxu0
        %v1531 = vadd.f32 %v1354, %v1530
        %v1532 = vpop.f32.mrf.mxu0
        %1533 = vmatprep.mubr.f32.mxu0 0.0
        %v1534 = vand.u32 %v237, 4294901760
        %1535 = vmatmul.mubr.f32.gmra.mxu0 %v1534
        %v1536 = vpop.f32.mrf.mxu0
        %v1537 = vadd.f32 %v1360, %v1536
        %v1538 = vpop.f32.mrf.mxu0
        %1539 = vdwg.mxu0
        %v1540 = vlaneseq
        %v1541 = vshrl.u32 %v1540, 7
        %v1542 = vadd.s32 %v1541, 8
        %v1543 = vadd.s32 %v1541, 16
        %v1544 = vadd.s32 %v1541, 24
        %v1545 = vadd.s32 %v1541, 32
        %v1546 = vadd.s32 %v1541, 40
        %v1547 = vadd.s32 %v1541, 48
        %v1548 = vadd.s32 %v1541, 56
        %v1549 = vadd.s32 %v1541, 64
        %v1550 = vadd.s32 %v1541, 72
        %v1551 = vadd.s32 %v1541, 80
        %v1552 = vadd.s32 %v1541, 88
        %v1553 = vadd.s32 %v1541, 96
        %v1554 = vadd.s32 %v1541, 104
        %v1555 = vadd.s32 %v1541, 112
        %v1556 = vadd.s32 %v1541, 120
        %s1557 = smul.u32 %s27, 128
        %v1558 = vstv %s1557
        %v1559 = vadd.s32 %v1541, %v1558
        %v1560 = vadd.s32 %v1542, %v1558
        %v1561 = vadd.s32 %v1543, %v1558
        %v1562 = vadd.s32 %v1544, %v1558
        %v1563 = vadd.s32 %v1545, %v1558
        %v1564 = vadd.s32 %v1546, %v1558
        %v1565 = vadd.s32 %v1547, %v1558
        %v1566 = vadd.s32 %v1548, %v1558
        %v1567 = vadd.s32 %v1549, %v1558
        %v1568 = vadd.s32 %v1550, %v1558
        %v1569 = vadd.s32 %v1551, %v1558
        %v1570 = vadd.s32 %v1552, %v1558
        %v1571 = vadd.s32 %v1553, %v1558
        %v1572 = vadd.s32 %v1554, %v1558
        %v1573 = vadd.s32 %v1555, %v1558
        %v1574 = vadd.s32 %v1556, %v1558
        %v1575 = vlaneseq
        %v1576 = vand.u32 %v1575, 127
        %vm1577 = vcmp.eq.s32.totalorder %v1559, %v1576
        %vm1578 = vcmp.eq.s32.totalorder %v1560, %v1576
        %vm1579 = vcmp.eq.s32.totalorder %v1561, %v1576
        %vm1580 = vcmp.eq.s32.totalorder %v1562, %v1576
        %vm1581 = vcmp.eq.s32.totalorder %v1563, %v1576
        %vm1582 = vcmp.eq.s32.totalorder %v1564, %v1576
        %vm1583 = vcmp.eq.s32.totalorder %v1565, %v1576
        %vm1584 = vcmp.eq.s32.totalorder %v1566, %v1576
        %vm1585 = vcmp.eq.s32.totalorder %v1567, %v1576
        %vm1586 = vcmp.eq.s32.totalorder %v1568, %v1576
        %vm1587 = vcmp.eq.s32.totalorder %v1569, %v1576
        %vm1588 = vcmp.eq.s32.totalorder %v1570, %v1576
        %vm1589 = vcmp.eq.s32.totalorder %v1571, %v1576
        %vm1590 = vcmp.eq.s32.totalorder %v1572, %v1576
        %vm1591 = vcmp.eq.s32.totalorder %v1573, %v1576
        %vm1592 = vcmp.eq.s32.totalorder %v1574, %v1576
        %v1593 = vsel %vm1577, 0.0, %v1447
        %v1594 = vsel %vm1578, 0.0, %v1453
        %v1595 = vsel %vm1579, 0.0, %v1459
        %v1596 = vsel %vm1580, 0.0, %v1465
        %v1597 = vsel %vm1581, 0.0, %v1471
        %v1598 = vsel %vm1582, 0.0, %v1477
        %v1599 = vsel %vm1583, 0.0, %v1483
        %v1600 = vsel %vm1584, 0.0, %v1489
        %v1601 = vsel %vm1585, 0.0, %v1495
        %v1602 = vsel %vm1586, 0.0, %v1501
        %v1603 = vsel %vm1587, 0.0, %v1507
        %v1604 = vsel %vm1588, 0.0, %v1513
        %v1605 = vsel %vm1589, 0.0, %v1519
        %v1606 = vsel %vm1590, 0.0, %v1525
        %v1607 = vsel %vm1591, 0.0, %v1531
        %v1608 = vsel %vm1592, 0.0, %v1537
        %vm1609 = vcmp.ge.s32.totalorder %v1576, 16
        %v1610 = vsel %vm1609, 1, 0
        %vm1611 = vcmp.eq.s32.totalorder %v1610, 1
        %v1612 = vsel %vm1611, -1e+30, %v1593
        %v1613 = vsel %vm1611, -1e+30, %v1594
        %v1614 = vsel %vm1611, -1e+30, %v1595
        %v1615 = vsel %vm1611, -1e+30, %v1596
        %v1616 = vsel %vm1611, -1e+30, %v1597
        %v1617 = vsel %vm1611, -1e+30, %v1598
        %v1618 = vsel %vm1611, -1e+30, %v1599
        %v1619 = vsel %vm1611, -1e+30, %v1600
        %v1620 = vsel %vm1611, -1e+30, %v1601
        %v1621 = vsel %vm1611, -1e+30, %v1602
        %v1622 = vsel %vm1611, -1e+30, %v1603
        %v1623 = vsel %vm1611, -1e+30, %v1604
        %v1624 = vsel %vm1611, -1e+30, %v1605
        %v1625 = vsel %vm1611, -1e+30, %v1606
        %v1626 = vsel %vm1611, -1e+30, %v1607
        %v1627 = vsel %vm1611, -1e+30, %v1608
        %1628 = vmax.xlane.f32.xlu0 %v1612
        %v1629 = vpop.xlane.xlu0 %1628
        %1630 = vmax.xlane.f32.xlu0 %v1613
        %v1631 = vpop.xlane.xlu0 %1630
        %1632 = vmax.xlane.f32.xlu0 %v1614
        %v1633 = vpop.xlane.xlu0 %1632
        %1634 = vmax.xlane.f32.xlu0 %v1615
        %v1635 = vpop.xlane.xlu0 %1634
        %1636 = vmax.xlane.f32.xlu0 %v1616
        %v1637 = vpop.xlane.xlu0 %1636
        %1638 = vmax.xlane.f32.xlu0 %v1617
        %v1639 = vpop.xlane.xlu0 %1638
        %1640 = vmax.xlane.f32.xlu0 %v1618
        %v1641 = vpop.xlane.xlu0 %1640
        %1642 = vmax.xlane.f32.xlu0 %v1619
        %v1643 = vpop.xlane.xlu0 %1642
        %1644 = vmax.xlane.f32.xlu0 %v1620
        %v1645 = vpop.xlane.xlu0 %1644
        %1646 = vmax.xlane.f32.xlu0 %v1621
        %v1647 = vpop.xlane.xlu0 %1646
        %1648 = vmax.xlane.f32.xlu0 %v1622
        %v1649 = vpop.xlane.xlu0 %1648
        %1650 = vmax.xlane.f32.xlu0 %v1623
        %v1651 = vpop.xlane.xlu0 %1650
        %1652 = vmax.xlane.f32.xlu0 %v1624
        %v1653 = vpop.xlane.xlu0 %1652
        %1654 = vmax.xlane.f32.xlu0 %v1625
        %v1655 = vpop.xlane.xlu0 %1654
        %1656 = vmax.xlane.f32.xlu0 %v1626
        %v1657 = vpop.xlane.xlu0 %1656
        %1658 = vmax.xlane.f32.xlu0 %v1627
        %v1659 = vpop.xlane.xlu0 %1658
        %v1660 = vsub.f32 %v1612, %v1629
        %v1661 = vsub.f32 %v1613, %v1631
        %v1662 = vsub.f32 %v1614, %v1633
        %v1663 = vsub.f32 %v1615, %v1635
        %v1664 = vsub.f32 %v1616, %v1637
        %v1665 = vsub.f32 %v1617, %v1639
        %v1666 = vsub.f32 %v1618, %v1641
        %v1667 = vsub.f32 %v1619, %v1643
        %v1668 = vsub.f32 %v1620, %v1645
        %v1669 = vsub.f32 %v1621, %v1647
        %v1670 = vsub.f32 %v1622, %v1649
        %v1671 = vsub.f32 %v1623, %v1651
        %v1672 = vsub.f32 %v1624, %v1653
        %v1673 = vsub.f32 %v1625, %v1655
        %v1674 = vsub.f32 %v1626, %v1657
        %v1675 = vsub.f32 %v1627, %v1659
        %v1676 = vmul.f32 %v1660, 1.442695
        %v1677 = vpow.pop %v1676
        %v1678 = vmul.f32 %v1661, 1.442695
        %v1679 = vpow.pop %v1678
        %v1680 = vmul.f32 %v1662, 1.442695
        %v1681 = vpow.pop %v1680
        %v1682 = vmul.f32 %v1663, 1.442695
        %v1683 = vpow.pop %v1682
        %v1684 = vmul.f32 %v1664, 1.442695
        %v1685 = vpow.pop %v1684
        %v1686 = vmul.f32 %v1665, 1.442695
        %v1687 = vpow.pop %v1686
        %v1688 = vmul.f32 %v1666, 1.442695
        %v1689 = vpow.pop %v1688
        %v1690 = vmul.f32 %v1667, 1.442695
        %v1691 = vpow.pop %v1690
        %v1692 = vmul.f32 %v1668, 1.442695
        %v1693 = vpow.pop %v1692
        %v1694 = vmul.f32 %v1669, 1.442695
        %v1695 = vpow.pop %v1694
        %v1696 = vmul.f32 %v1670, 1.442695
        %v1697 = vpow.pop %v1696
        %v1698 = vmul.f32 %v1671, 1.442695
        %v1699 = vpow.pop %v1698
        %v1700 = vmul.f32 %v1672, 1.442695
        %v1701 = vpow.pop %v1700
        %v1702 = vmul.f32 %v1673, 1.442695
        %v1703 = vpow.pop %v1702
        %v1704 = vmul.f32 %v1674, 1.442695
        %v1705 = vpow.pop %v1704
        %v1706 = vmul.f32 %v1675, 1.442695
        %v1707 = vpow.pop %v1706
        %v1708 = vsel %vm1577, 0.0, %v1677
        %v1709 = vsel %vm1578, 0.0, %v1679
        %v1710 = vsel %vm1579, 0.0, %v1681
        %v1711 = vsel %vm1580, 0.0, %v1683
        %v1712 = vsel %vm1581, 0.0, %v1685
        %v1713 = vsel %vm1582, 0.0, %v1687
        %v1714 = vsel %vm1583, 0.0, %v1689
        %v1715 = vsel %vm1584, 0.0, %v1691
        %v1716 = vsel %vm1585, 0.0, %v1693
        %v1717 = vsel %vm1586, 0.0, %v1695
        %v1718 = vsel %vm1587, 0.0, %v1697
        %v1719 = vsel %vm1588, 0.0, %v1699
        %v1720 = vsel %vm1589, 0.0, %v1701
        %v1721 = vsel %vm1590, 0.0, %v1703
        %v1722 = vsel %vm1591, 0.0, %v1705
        %v1723 = vsel %vm1592, 0.0, %v1707
        %1724 = vadd.xlane.f32.xlu0 %v1677
        %v1725 = vpop.xlane.xlu0 %1724
        %1726 = vadd.xlane.f32.xlu0 %v1679
        %v1727 = vpop.xlane.xlu0 %1726
        %1728 = vadd.xlane.f32.xlu0 %v1681
        %v1729 = vpop.xlane.xlu0 %1728
        %1730 = vadd.xlane.f32.xlu0 %v1683
        %v1731 = vpop.xlane.xlu0 %1730
        %1732 = vadd.xlane.f32.xlu0 %v1685
        %v1733 = vpop.xlane.xlu0 %1732
        %1734 = vadd.xlane.f32.xlu0 %v1687
        %v1735 = vpop.xlane.xlu0 %1734
        %1736 = vadd.xlane.f32.xlu0 %v1689
        %v1737 = vpop.xlane.xlu0 %1736
        %1738 = vadd.xlane.f32.xlu0 %v1691
        %v1739 = vpop.xlane.xlu0 %1738
        %1740 = vadd.xlane.f32.xlu0 %v1693
        %v1741 = vpop.xlane.xlu0 %1740
        %1742 = vadd.xlane.f32.xlu0 %v1695
        %v1743 = vpop.xlane.xlu0 %1742
        %1744 = vadd.xlane.f32.xlu0 %v1697
        %v1745 = vpop.xlane.xlu0 %1744
        %1746 = vadd.xlane.f32.xlu0 %v1699
        %v1747 = vpop.xlane.xlu0 %1746
        %1748 = vadd.xlane.f32.xlu0 %v1701
        %v1749 = vpop.xlane.xlu0 %1748
        %1750 = vadd.xlane.f32.xlu0 %v1703
        %v1751 = vpop.xlane.xlu0 %1750
        %1752 = vadd.xlane.f32.xlu0 %v1705
        %v1753 = vpop.xlane.xlu0 %1752
        %1754 = vadd.xlane.f32.xlu0 %v1707
        %v1755 = vpop.xlane.xlu0 %1754
        %v1756 = vrcp.pop %v1725
        %v1757 = vmul.f32 1.0, %v1756
        %v1758 = vrcp.pop %v1727
        %v1759 = vmul.f32 1.0, %v1758
        %v1760 = vrcp.pop %v1729
        %v1761 = vmul.f32 1.0, %v1760
        %v1762 = vrcp.pop %v1731
        %v1763 = vmul.f32 1.0, %v1762
        %v1764 = vrcp.pop %v1733
        %v1765 = vmul.f32 1.0, %v1764
        %v1766 = vrcp.pop %v1735
        %v1767 = vmul.f32 1.0, %v1766
        %v1768 = vrcp.pop %v1737
        %v1769 = vmul.f32 1.0, %v1768
        %v1770 = vrcp.pop %v1739
        %v1771 = vmul.f32 1.0, %v1770
        %v1772 = vrcp.pop %v1741
        %v1773 = vmul.f32 1.0, %v1772
        %v1774 = vrcp.pop %v1743
        %v1775 = vmul.f32 1.0, %v1774
        %v1776 = vrcp.pop %v1745
        %v1777 = vmul.f32 1.0, %v1776
        %v1778 = vrcp.pop %v1747
        %v1779 = vmul.f32 1.0, %v1778
        %v1780 = vrcp.pop %v1749
        %v1781 = vmul.f32 1.0, %v1780
        %v1782 = vrcp.pop %v1751
        %v1783 = vmul.f32 1.0, %v1782
        %v1784 = vrcp.pop %v1753
        %v1785 = vmul.f32 1.0, %v1784
        %v1786 = vrcp.pop %v1755
        %v1787 = vmul.f32 1.0, %v1786
        %1788 = vmax.xlane.f32.xlu0 %v1708
        %v1789 = vpop.xlane.xlu0 %1788
        %1790 = vmax.xlane.f32.xlu0 %v1709
        %v1791 = vpop.xlane.xlu0 %1790
        %1792 = vmax.xlane.f32.xlu0 %v1710
        %v1793 = vpop.xlane.xlu0 %1792
        %1794 = vmax.xlane.f32.xlu0 %v1711
        %v1795 = vpop.xlane.xlu0 %1794
        %1796 = vmax.xlane.f32.xlu0 %v1712
        %v1797 = vpop.xlane.xlu0 %1796
        %1798 = vmax.xlane.f32.xlu0 %v1713
        %v1799 = vpop.xlane.xlu0 %1798
        %1800 = vmax.xlane.f32.xlu0 %v1714
        %v1801 = vpop.xlane.xlu0 %1800
        %1802 = vmax.xlane.f32.xlu0 %v1715
        %v1803 = vpop.xlane.xlu0 %1802
        %1804 = vmax.xlane.f32.xlu0 %v1716
        %v1805 = vpop.xlane.xlu0 %1804
        %1806 = vmax.xlane.f32.xlu0 %v1717
        %v1807 = vpop.xlane.xlu0 %1806
        %1808 = vmax.xlane.f32.xlu0 %v1718
        %v1809 = vpop.xlane.xlu0 %1808
        %1810 = vmax.xlane.f32.xlu0 %v1719
        %v1811 = vpop.xlane.xlu0 %1810
        %1812 = vmax.xlane.f32.xlu0 %v1720
        %v1813 = vpop.xlane.xlu0 %1812
        %1814 = vmax.xlane.f32.xlu0 %v1721
        %v1815 = vpop.xlane.xlu0 %1814
        %1816 = vmax.xlane.f32.xlu0 %v1722
        %v1817 = vpop.xlane.xlu0 %1816
        %1818 = vmax.xlane.f32.xlu0 %v1723
        %v1819 = vpop.xlane.xlu0 %1818
        %v1820 = vmul.f32 %v1789, %v1757
        %v1821 = vmul.f32 %v1791, %v1759
        %v1822 = vmul.f32 %v1793, %v1761
        %v1823 = vmul.f32 %v1795, %v1763
        %v1824 = vmul.f32 %v1797, %v1765
        %v1825 = vmul.f32 %v1799, %v1767
        %v1826 = vmul.f32 %v1801, %v1769
        %v1827 = vmul.f32 %v1803, %v1771
        %v1828 = vmul.f32 %v1805, %v1773
        %v1829 = vmul.f32 %v1807, %v1775
        %v1830 = vmul.f32 %v1809, %v1777
        %v1831 = vmul.f32 %v1811, %v1779
        %v1832 = vmul.f32 %v1813, %v1781
        %v1833 = vmul.f32 %v1815, %v1783
        %v1834 = vmul.f32 %v1817, %v1785
        %v1835 = vmul.f32 %v1819, %v1787
        %v1836 = vadd.f32 %v1820, 1.1920929e-07
        %v1837 = vadd.f32 %v1821, 1.1920929e-07
        %v1838 = vadd.f32 %v1822, 1.1920929e-07
        %v1839 = vadd.f32 %v1823, 1.1920929e-07
        %v1840 = vadd.f32 %v1824, 1.1920929e-07
        %v1841 = vadd.f32 %v1825, 1.1920929e-07
        %v1842 = vadd.f32 %v1826, 1.1920929e-07
        %v1843 = vadd.f32 %v1827, 1.1920929e-07
        %v1844 = vadd.f32 %v1828, 1.1920929e-07
        %v1845 = vadd.f32 %v1829, 1.1920929e-07
        %v1846 = vadd.f32 %v1830, 1.1920929e-07
        %v1847 = vadd.f32 %v1831, 1.1920929e-07
        %v1848 = vadd.f32 %v1832, 1.1920929e-07
        %v1849 = vadd.f32 %v1833, 1.1920929e-07
        %v1850 = vadd.f32 %v1834, 1.1920929e-07
        %v1851 = vadd.f32 %v1835, 1.1920929e-07
        %v1852 = vrcp.pop %v1836
        %v1853 = vmul.f32 %v1757, %v1852
        %v1854 = vrcp.pop %v1837
        %v1855 = vmul.f32 %v1759, %v1854
        %v1856 = vrcp.pop %v1838
        %v1857 = vmul.f32 %v1761, %v1856
        %v1858 = vrcp.pop %v1839
        %v1859 = vmul.f32 %v1763, %v1858
        %v1860 = vrcp.pop %v1840
        %v1861 = vmul.f32 %v1765, %v1860
        %v1862 = vrcp.pop %v1841
        %v1863 = vmul.f32 %v1767, %v1862
        %v1864 = vrcp.pop %v1842
        %v1865 = vmul.f32 %v1769, %v1864
        %v1866 = vrcp.pop %v1843
        %v1867 = vmul.f32 %v1771, %v1866
        %v1868 = vrcp.pop %v1844
        %v1869 = vmul.f32 %v1773, %v1868
        %v1870 = vrcp.pop %v1845
        %v1871 = vmul.f32 %v1775, %v1870
        %v1872 = vrcp.pop %v1846
        %v1873 = vmul.f32 %v1777, %v1872
        %v1874 = vrcp.pop %v1847
        %v1875 = vmul.f32 %v1779, %v1874
        %v1876 = vrcp.pop %v1848
        %v1877 = vmul.f32 %v1781, %v1876
        %v1878 = vrcp.pop %v1849
        %v1879 = vmul.f32 %v1783, %v1878
        %v1880 = vrcp.pop %v1850
        %v1881 = vmul.f32 %v1785, %v1880
        %v1882 = vrcp.pop %v1851
        %v1883 = vmul.f32 %v1787, %v1882
        %v1884 = vmul.f32 %v1708, %v1853
        %v1885 = vmul.f32 %v1709, %v1855
        %v1886 = vmul.f32 %v1710, %v1857
        %v1887 = vmul.f32 %v1711, %v1859
        %v1888 = vmul.f32 %v1712, %v1861
        %v1889 = vmul.f32 %v1713, %v1863
        %v1890 = vmul.f32 %v1714, %v1865
        %v1891 = vmul.f32 %v1715, %v1867
        %v1892 = vmul.f32 %v1716, %v1869
        %v1893 = vmul.f32 %v1717, %v1871
        %v1894 = vmul.f32 %v1718, %v1873
        %v1895 = vmul.f32 %v1719, %v1875
        %v1896 = vmul.f32 %v1720, %v1877
        %v1897 = vmul.f32 %v1721, %v1879
        %v1898 = vmul.f32 %v1722, %v1881
        %v1899 = vmul.f32 %v1723, %v1883
        %1900 = vst [vmem:[%s219] sm:$0xff] %v1884
        %1901 = vst [vmem:[%s219 + $0x8] sm:$0xff] %v1885
        %1902 = vst [vmem:[%s219 + $0x10] sm:$0xff] %v1886
        %1903 = vst [vmem:[%s219 + $0x18] sm:$0xff] %v1887
        %1904 = vst [vmem:[%s219 + $0x20] sm:$0xff] %v1888
        %1905 = vst [vmem:[%s219 + $0x28] sm:$0xff] %v1889
        %1906 = vst [vmem:[%s219 + $0x30] sm:$0xff] %v1890
        %1907 = vst [vmem:[%s219 + $0x38] sm:$0xff] %v1891
        %1908 = vst [vmem:[%s219 + $0x40] sm:$0xff] %v1892
        %1909 = vst [vmem:[%s219 + $0x48] sm:$0xff] %v1893
        %1910 = vst [vmem:[%s219 + $0x50] sm:$0xff] %v1894
        %1911 = vst [vmem:[%s219 + $0x58] sm:$0xff] %v1895
        %1912 = vst [vmem:[%s219 + $0x60] sm:$0xff] %v1896
        %1913 = vst [vmem:[%s219 + $0x68] sm:$0xff] %v1897
        %1914 = vst [vmem:[%s219 + $0x70] sm:$0xff] %v1898
        %1915 = vst [vmem:[%s219 + $0x78] sm:$0xff] %v1899
        %s1916 = sand.u32 %s98, 1
        %s1917 = scalar_lea.sflag [#allocation4], %s1916
        %s1918 = sand.u32 %s98, 1
        %s1919 = smul.addr %s1918, 128
        %s1920 = scalar_lea.vmem [#allocation7], %s1919
        // Predicated region
        $region37: #{tpu_custom_call.1} parent=27 // pred_check
          %p1921 = pneg %p108
        $region38: #{tpu_custom_call.1} parent=27 // pred_check_branch
          %1923 = sbr.rel (%p1921) target = $region40
        $region39: #{tpu_custom_call.1} parent=27 // pred_region
          %s1924 = smul.u32 16, %s27
          %s1926 = ssub.s32 2048, 2048
          %1927 = vsyncadd %s1917, %s1926
          %s1928 = smul.addr %s26, 16
          %s1929 = sadd.s32 %s1924, %s1928
          %s1930 = smul.addr %s1929, 128
          %s1931 = scalar_lea.hbm %s2, %s1930
          %s1932 = sshll.u32 %s1920, 4
          %s1933 = int_to_ptr.vmem [resolvable:$true] %s1932
          %1938 = dma.vmem_to_hbm [thread:$0]  %s1933, 2048, %s1931, %s1917, 128, 128, 8
        $region40: #{tpu_custom_call.1} parent=27 // pred_fallthru
          _
      $region28: #{tpu_custom_call.1} parent=5 // pred_fallthru
        _
      %p1939 = scmp.le.s32.totalorder 2, %s17
      // Predicated region
      $region41: #{tpu_custom_call.1} parent=5 // pred_check
        %p1940 = pneg %p1939
      $region42: #{tpu_custom_call.1} parent=5 // pred_check_branch
        %1942 = sbr.rel (%p1940) target = $region44
      $region43: #{tpu_custom_call.1} parent=5 // pred_region
        %s1943 = ssub.s32 %s17, 2
        // Predicated region
        $region45: #{tpu_custom_call.1} parent=43 // pred_check
          %p1944 = pneg %p114
        $region46: #{tpu_custom_call.1} parent=43 // pred_check_branch
          %1946 = sbr.rel (%p1944) target = $region48
        $region47: #{tpu_custom_call.1} parent=43 // pred_region
          %s1947 = sand.u32 %s99, 1
          %s1948 = scalar_lea.sflag [#allocation4], %s1947
          %s1949 = sand.u32 %s99, 1
          %s1950 = smul.addr %s1949, 128
          %s1951 = scalar_lea.vmem [#allocation7], %s1950
          %1952 = dma.done %s1948, 2048
        $region48: #{tpu_custom_call.1} parent=43 // pred_fallthru
          _
      $region44: #{tpu_custom_call.1} parent=5 // pred_fallthru
        _
    $region6: #{tpu_custom_call.1} parent=1 // loop_footer
      %s21 = sadd.s32 1, %s17
    $region7: #{tpu_custom_call.1} parent=1 // loop_footer_branch
      %16 = sbr.rel target = $region3
    $region8: #{tpu_custom_call.1} parent=1 // loop_exit
      _
    %1953 = vsyncpa [#allocation3], 1
    %s1954 = scalar_lea.sflag [#allocation3], 1
    %1955 = vsyncpa %s1954, 1
    %1956 = vsyncpa [#allocation6], 1
    %s1957 = scalar_lea.sflag [#allocation6], 1
    %1958 = vsyncpa %s1957, 1
    %1959 = vsyncpa [#allocation4], 1
    %s1960 = scalar_lea.sflag [#allocation4], 1
    %1961 = vsyncpa %s1960, 1

</llo_original>
